<compile_context>
chip_gen: v5e
topology: v5e:2x2
jax: 0.10.0
libtpu: 0.0.40
codegen_flags: <defaults>
</compile_context>

<pallas_src>
import jax
import jax.numpy as jnp
from jax.experimental import pallas as pl
from jax.experimental.pallas import tpu as pltpu

# ---- logical (module) shapes ------------------------------------------------
T = 8          # aligned audio/video frames per clip
H = W = 16     # video frame spatial size (grayscale, C=1)
A = 32         # audio feature dim (mel bins)
D = 32         # model hidden / output feature dim
V = 16         # vocab size for the greedy decode head
P = H * W      # flattened pixels per frame (256)

# ---- lane-padded kernel shapes (everything 128-lane dense) -------------------
AP = 128       # padded audio lanes (cols >= A are zero)
DP = 128       # padded feature lanes: video feats 0:D, audio feats D:2D
VP = 128       # padded vocab lanes
TM = 128       # rows (frames) per grid step -> MXU M dimension
B = 32         # clips batched per call; B*T must be a multiple of TM
NEG_INF = -1e30
EPS = 1e-5


def avsr_kernel(video_ref, audio_ref, w_front_ref, w_rest_ref, b_all_ref,
                feats_ref, tok_ref):
    # ---- preprocessor: per-frame mean/var normalization (f32, two-pass) -----
    v = video_ref[...]                                       # [TM, P] f32
    v_mean = jnp.mean(v, axis=-1, keepdims=True)
    v_c = v - v_mean
    v_var = jnp.mean(v_c * v_c, axis=-1, keepdims=True)
    vn = v_c * jax.lax.rsqrt(v_var + EPS)

    a = audio_ref[...]                                       # [TM, AP] f32
    lane = jax.lax.broadcasted_iota(jnp.int32, a.shape, 1)
    valid = lane < A
    inv_a = 1.0 / A
    a_mean = jnp.sum(jnp.where(valid, a, 0.0), axis=-1, keepdims=True) * inv_a
    a_c = jnp.where(valid, a - a_mean, 0.0)   # padded lanes forced to exact 0
    a_var = jnp.sum(a_c * a_c, axis=-1, keepdims=True) * inv_a
    an = a_c * jax.lax.rsqrt(a_var + EPS)

    # ---- biases (one resident f32 slab, sliced at aligned lane offsets) -----
    b_front = b_all_ref[0:1, 0:DP]
    b_fuse = b_all_ref[1:2, 0:DP]
    b_tail = b_all_ref[2:3, 0:2 * DP]

    # ---- model frontend: two accumulating bf16 dots (no lane concat) --------
    vf = jnp.dot(vn.astype(jnp.bfloat16), w_front_ref[0:P, :],
                 preferred_element_type=jnp.float32)
    af = jnp.dot(an.astype(jnp.bfloat16), w_front_ref[P:P + AP, :],
                 preferred_element_type=jnp.float32)
    front = jnp.maximum(vf + af + b_front, 0.0)   # [TM, DP]: v feats 0:D, a feats D:2D

    # ---- fusion encoder ------------------------------------------------------
    fused = jnp.maximum(
        jnp.dot(front.astype(jnp.bfloat16), w_rest_ref[:, 0:DP],
                preferred_element_type=jnp.float32) + b_fuse, 0.0)   # [TM, DP]

    # ---- out-projection + vocab head fused into one N=256 tail matmul -------
    tail = jnp.dot(fused.astype(jnp.bfloat16), w_rest_ref[:, DP:3 * DP],
                   preferred_element_type=jnp.float32) + b_tail      # [TM, 2*DP]
    feats = tail[:, 0:DP]
    logits = tail[:, DP:2 * DP]        # padded vocab lanes carry -1e30 bias
    feats_ref[...] = feats             # lane-dense full-width store

    # ---- greedy decode head (stand-in for decoder.infer beam search) --------
    max_val = jnp.max(logits, axis=-1, keepdims=True)
    idx = jax.lax.broadcasted_iota(jnp.int32, logits.shape, 1)
    tok = jnp.min(jnp.where(logits >= max_val, idx, jnp.int32(VP)),
                  axis=-1, keepdims=True)                    # first argmax, [TM, 1]
    tok_ref[...] = jnp.broadcast_to(tok, tok_ref.shape)      # lane-dense int32 store
    # TODO(synk): RNN-T beam search (decoder.infer, beam=10) with dynamic
    # hypothesis lists has no clean Pallas equivalent; greedy argmax used.


def make_params():
    """Deterministic synthetic weights at the module's logical shapes."""
    key = jax.random.PRNGKey(0)
    ks = jax.random.split(key, 11)

    def w(k, shape, fan_in):
        return jax.random.normal(k, shape, jnp.float32) * (2.0 / fan_in) ** 0.5

    def b(k, shape):
        return 0.1 * jax.random.normal(k, shape, jnp.float32)

    return (
        w(ks[0], (P, D), P), b(ks[1], (D,)),       # video frontend
        w(ks[2], (A, D), A), b(ks[3], (D,)),       # audio frontend
        w(ks[4], (D, D), 2 * D),                   # fusion (video half)
        w(ks[5], (D, D), 2 * D),                   # fusion (audio half)
        b(ks[6], (D,)),
        w(ks[7], (D, D), D), b(ks[8], (D,)),       # encoder output projection
        w(ks[9], (D, V), D), b(ks[10], (V,)),      # vocab head
    )


def pack_params(params):
    """Pad + fold the 11 logical params into 3 lane-dense resident slabs.

    Padding is numerically exact: padded weight rows/cols are zero and padded
    vocab-bias lanes are -1e30, so lanes 0:D / 0:V equal the unpadded math.
    """
    (wv, bv, wa, ba, wfv, wfa, bf1, wf2, bf2, wvoc, bvoc) = params

    # frontend: one [P+AP, DP] slab; video feats -> lanes 0:D, audio -> D:2D.
    w_front = jnp.zeros((P + AP, DP), jnp.float32)
    w_front = w_front.at[0:P, 0:D].set(wv)
    w_front = w_front.at[P:P + A, D:2 * D].set(wa)
    b_front = jnp.zeros((DP,), jnp.float32).at[0:D].set(bv).at[D:2 * D].set(ba)

    # fusion encoder: [DP, DP], rows 0:D <- video half, rows D:2D <- audio half.
    w_fuse = jnp.zeros((DP, DP), jnp.float32)
    w_fuse = w_fuse.at[0:D, 0:D].set(wfv)
    w_fuse = w_fuse.at[D:2 * D, 0:D].set(wfa)
    b_fuse = jnp.zeros((DP,), jnp.float32).at[0:D].set(bf1)

    # out-projection + vocab head folded into one tail slab (exact: no
    # nonlinearity between the two layers): tail = [feats | logits].
    w_out_p = jnp.zeros((DP, DP), jnp.float32).at[0:D, 0:D].set(wf2)
    b_out_p = jnp.zeros((DP,), jnp.float32).at[0:D].set(bf2)
    w_voc_p = jnp.zeros((DP, VP), jnp.float32).at[0:D, 0:V].set(wvoc)
    b_voc_p = jnp.full((VP,), NEG_INF, jnp.float32).at[0:V].set(bvoc)
    w_tail = jnp.concatenate([w_out_p, w_out_p @ w_voc_p], axis=1)     # [DP, 2*DP]
    b_tail = jnp.concatenate([b_out_p, b_out_p @ w_voc_p + b_voc_p])   # [2*DP]

    # weight slab [DP, 3*DP] bf16 = [fusion | tail]; bias slab (8, 3*DP) f32.
    w_rest = jnp.concatenate([w_fuse, w_tail], axis=1)
    b_all = jnp.zeros((8, 3 * DP), jnp.float32)
    b_all = b_all.at[0, 0:DP].set(b_front)
    b_all = b_all.at[1, 0:DP].set(b_fuse)
    b_all = b_all.at[2, 0:2 * DP].set(b_tail)

    return (w_front.astype(jnp.bfloat16),
            w_rest.astype(jnp.bfloat16),
            b_all)


def inference_pipeline(audio, video, packed):
    """audio: [B, T, A] f32; video: [B, T, 1, H, W] f32 (NCHW-style frames).

    Per-clip math matches the single-utterance PyTorch module; clips are only
    batched along the grid for TPU efficiency (MXU M=128 per step, resident
    weights, both TensorCores on v7x via "parallel").
    """
    w_front, w_rest, b_all = packed
    n_clips, t = audio.shape[0], audio.shape[1]
    n_rows = n_clips * t
    assert n_rows % TM == 0, "pad the clip batch so B*T is a multiple of 128"

    video2d = video.reshape(n_rows, P)                       # glue reshape
    audio_pad = jnp.pad(audio.reshape(n_rows, A), ((0, 0), (0, AP - A)))

    feats_pad, tok_pad = pl.pallas_call(
        avsr_kernel,
        out_shape=(jax.ShapeDtypeStruct((n_rows, DP), jnp.float32),
                   jax.ShapeDtypeStruct((n_rows, 128), jnp.int32)),
        grid_spec=pltpu.PrefetchScalarGridSpec(
            num_scalar_prefetch=0,
            grid=(n_rows // TM,),
            in_specs=[
                pl.BlockSpec((TM, P), lambda i: (i, 0)),
                pl.BlockSpec((TM, AP), lambda i: (i, 0)),
                pl.BlockSpec((P + AP, DP), lambda i: (0, 0)),   # weights: DMA once, resident
                pl.BlockSpec((DP, 3 * DP), lambda i: (0, 0)),   # weights: DMA once, resident
                pl.BlockSpec((8, 3 * DP), lambda i: (0, 0)),    # biases:  DMA once, resident
            ],
            out_specs=(
                pl.BlockSpec((TM, DP), lambda i: (i, 0)),
                pl.BlockSpec((TM, 128), lambda i: (i, 0)),
            )),
        compiler_params=pltpu.CompilerParams(
            dimension_semantics=("parallel",)),
    )(video2d, audio_pad, w_front, w_rest, b_all)

    feats = feats_pad[:, :D].reshape(n_clips, t, D)          # per-clip [T, D]
    length = jnp.full((n_clips,), t, dtype=jnp.int32)
    hypothesis = tok_pad[:, 0].reshape(n_clips, t)           # greedy token ids
    # TODO(synk): token_processor (string detokenization of the hypothesis)
    # is host-side string processing and cannot run in a TPU kernel.
    return feats, length, hypothesis


def reference_forward(audio, video, params):
    """Pure-JAX reference of preprocessor + model feats (bf16 weights)."""
    (wv, bv, wa, ba, wfv, wfa, bf1, wf2, bf2, wvoc, bvoc) = params
    bf = jnp.bfloat16
    n = audio.shape[0] * audio.shape[1]

    v = video.reshape(n, P)
    vm = jnp.mean(v, -1, keepdims=True)
    vc = v - vm
    vn = vc * jax.lax.rsqrt(jnp.mean(vc * vc, -1, keepdims=True) + EPS)

    a = audio.reshape(n, A)
    am = jnp.mean(a, -1, keepdims=True)
    ac = a - am
    an = ac * jax.lax.rsqrt(jnp.mean(ac * ac, -1, keepdims=True) + EPS)

    vfeat = jnp.maximum(jnp.dot(vn.astype(bf), wv.astype(bf),
                                preferred_element_type=jnp.float32) + bv, 0.0)
    afeat = jnp.maximum(jnp.dot(an.astype(bf), wa.astype(bf),
                                preferred_element_type=jnp.float32) + ba, 0.0)
    fused = jnp.maximum(
        jnp.dot(vfeat.astype(bf), wfv.astype(bf), preferred_element_type=jnp.float32)
        + jnp.dot(afeat.astype(bf), wfa.astype(bf), preferred_element_type=jnp.float32)
        + bf1, 0.0)
    feats = jnp.dot(fused.astype(bf), wf2.astype(bf),
                    preferred_element_type=jnp.float32) + bf2
    return feats.reshape(audio.shape[0], audio.shape[1], D)


if __name__ == "__main__":
    key = jax.random.PRNGKey(0)
    k_a, k_v = jax.random.split(key)
    audio = jax.random.normal(k_a, (B, T, A), jnp.float32)
    video = jax.random.uniform(k_v, (B, T, 1, H, W), jnp.float32)

    params = make_params()
    packed = pack_params(params)

    feats, length, hyp = inference_pipeline(audio, video, packed)
    jax.block_until_ready((feats, length, hyp))

    assert feats.shape == (B, T, D)
    assert bool(jnp.all(length == T))
    assert hyp.shape == (B, T)
    assert bool(jnp.all(jnp.isfinite(feats)))
    assert bool(jnp.all((hyp >= 0) & (hyp < V)))

    ref = reference_forward(audio, video, params)
    assert bool(jnp.allclose(feats, ref, rtol=5e-2, atol=5e-2)), \
        float(jnp.max(jnp.abs(feats - ref)))

    print("KERNEL_OK")
</pallas_src>

<mosaic_0001>
module attributes {stable_mosaic.version = 11 : i64} {
  func.func @avsr_kernel(%arg0: i32, %arg1: memref<128x256xf32, #tpu.memory_space<vmem>>, %arg2: memref<128x128xf32, #tpu.memory_space<vmem>>, %arg3: memref<384x128xbf16, #tpu.memory_space<vmem>>, %arg4: memref<128x384xbf16, #tpu.memory_space<vmem>>, %arg5: memref<8x384xf32, #tpu.memory_space<vmem>>, %arg6: memref<128x128xf32, #tpu.memory_space<vmem>>, %arg7: memref<128x128xi32, #tpu.memory_space<vmem>>) attributes {dimension_semantics = [#tpu.dimension_semantics<parallel>], iteration_bounds = array<i64: 2>, scalar_prefetch = 0 : i64, scratch_operands = 0 : i64, tpu.core_type = #tpu.core_type<tc>, window_params = [{transform_indices = @transform_0, window_bounds = array<i64: 128, 256>}, {transform_indices = @transform_1, window_bounds = array<i64: 128, 128>}, {pipeline_mode = #tpu.pipeline_mode<synchronous>, transform_indices = @transform_2, window_bounds = array<i64: 384, 128>}, {pipeline_mode = #tpu.pipeline_mode<synchronous>, transform_indices = @transform_3, window_bounds = array<i64: 128, 384>}, {pipeline_mode = #tpu.pipeline_mode<synchronous>, transform_indices = @transform_4, window_bounds = array<i64: 8, 384>}, {transform_indices = @transform_5, window_bounds = array<i64: 128, 128>}, {transform_indices = @transform_6, window_bounds = array<i64: 128, 128>}]} {
    %c0 = arith.constant 0 : index
    %c0_0 = arith.constant 0 : index
    %0 = vector.load %arg1[%c0, %c0_0] : memref<128x256xf32, #tpu.memory_space<vmem>>, vector<128x256xf32>
    %cst = arith.constant dense<0.000000e+00> : vector<128xf32>
    %1 = vector.multi_reduction <add>, %0, %cst [1] : vector<128x256xf32> to vector<128xf32>
    %2 = vector.shape_cast %1 : vector<128xf32> to vector<128x1xf32>
    %cst_1 = arith.constant 2.560000e+02 : f32
    %3 = vector.broadcast %cst_1 : f32 to vector<128x1xf32>
    %4 = arith.divf %2, %3 : vector<128x1xf32>
    %5 = vector.broadcast %4 : vector<128x1xf32> to vector<128x256xf32>
    %6 = arith.subf %0, %5 : vector<128x256xf32>
    %7 = arith.mulf %6, %6 : vector<128x256xf32>
    %cst_2 = arith.constant dense<0.000000e+00> : vector<128xf32>
    %8 = vector.multi_reduction <add>, %7, %cst_2 [1] : vector<128x256xf32> to vector<128xf32>
    %9 = vector.shape_cast %8 : vector<128xf32> to vector<128x1xf32>
    %cst_3 = arith.constant 2.560000e+02 : f32
    %10 = vector.broadcast %cst_3 : f32 to vector<128x1xf32>
    %11 = arith.divf %9, %10 : vector<128x1xf32>
    %cst_4 = arith.constant 9.99999974E-6 : f32
    %12 = vector.broadcast %cst_4 : f32 to vector<128x1xf32>
    %13 = arith.addf %11, %12 : vector<128x1xf32>
    %14 = math.rsqrt %13 : vector<128x1xf32>
    %15 = vector.broadcast %14 : vector<128x1xf32> to vector<128x256xf32>
    %16 = arith.mulf %6, %15 : vector<128x256xf32>
    %c0_5 = arith.constant 0 : index
    %c0_6 = arith.constant 0 : index
    %17 = vector.load %arg2[%c0_5, %c0_6] : memref<128x128xf32, #tpu.memory_space<vmem>>, vector<128x128xf32>
    %18 = tpu.iota {dimensions = array<i32: 1>} : vector<128x128xi32>
    %c32_i32 = arith.constant 32 : i32
    %19 = vector.broadcast %c32_i32 : i32 to vector<128x128xi32>
    %20 = arith.cmpi slt, %18, %19 : vector<128x128xi32>
    %cst_7 = arith.constant 0.000000e+00 : f32
    %21 = vector.broadcast %cst_7 : f32 to vector<128x128xf32>
    %22 = arith.select %20, %17, %21 : vector<128x128xi1>, vector<128x128xf32>
    %cst_8 = arith.constant dense<0.000000e+00> : vector<128xf32>
    %23 = vector.multi_reduction <add>, %22, %cst_8 [1] : vector<128x128xf32> to vector<128xf32>
    %24 = vector.shape_cast %23 : vector<128xf32> to vector<128x1xf32>
    %cst_9 = arith.constant 3.125000e-02 : f32
    %25 = vector.broadcast %cst_9 : f32 to vector<128x1xf32>
    %26 = arith.mulf %24, %25 : vector<128x1xf32>
    %27 = vector.broadcast %26 : vector<128x1xf32> to vector<128x128xf32>
    %28 = arith.subf %17, %27 : vector<128x128xf32>
    %cst_10 = arith.constant 0.000000e+00 : f32
    %29 = vector.broadcast %cst_10 : f32 to vector<128x128xf32>
    %30 = arith.select %20, %28, %29 : vector<128x128xi1>, vector<128x128xf32>
    %31 = arith.mulf %30, %30 : vector<128x128xf32>
    %cst_11 = arith.constant dense<0.000000e+00> : vector<128xf32>
    %32 = vector.multi_reduction <add>, %31, %cst_11 [1] : vector<128x128xf32> to vector<128xf32>
    %33 = vector.shape_cast %32 : vector<128xf32> to vector<128x1xf32>
    %cst_12 = arith.constant 3.125000e-02 : f32
    %34 = vector.broadcast %cst_12 : f32 to vector<128x1xf32>
    %35 = arith.mulf %33, %34 : vector<128x1xf32>
    %cst_13 = arith.constant 9.99999974E-6 : f32
    %36 = vector.broadcast %cst_13 : f32 to vector<128x1xf32>
    %37 = arith.addf %35, %36 : vector<128x1xf32>
    %38 = math.rsqrt %37 : vector<128x1xf32>
    %39 = vector.broadcast %38 : vector<128x1xf32> to vector<128x128xf32>
    %40 = arith.mulf %30, %39 : vector<128x128xf32>
    %c0_14 = arith.constant 0 : index
    %c0_15 = arith.constant 0 : index
    %41 = vector.load %arg5[%c0_14, %c0_15] : memref<8x384xf32, #tpu.memory_space<vmem>>, vector<1x128xf32>
    %c1 = arith.constant 1 : index
    %c0_16 = arith.constant 0 : index
    %42 = vector.load %arg5[%c1, %c0_16] : memref<8x384xf32, #tpu.memory_space<vmem>>, vector<1x128xf32>
    %c2 = arith.constant 2 : index
    %c0_17 = arith.constant 0 : index
    %43 = vector.load %arg5[%c2, %c0_17] : memref<8x384xf32, #tpu.memory_space<vmem>>, vector<1x256xf32>
    %44 = arith.truncf %16 : vector<128x256xf32> to vector<128x256xbf16>
    %c0_18 = arith.constant 0 : index
    %c0_19 = arith.constant 0 : index
    %45 = vector.load %arg3[%c0_18, %c0_19] : memref<384x128xbf16, #tpu.memory_space<vmem>>, vector<256x128xbf16>
    %cst_20 = arith.constant dense<0.000000e+00> : vector<128x128xf32>
    %46 = tpu.matmul %44, %45, %cst_20 {dimension_numbers = #tpu.dot_dimension_numbers<[1], [0], [0], [1], [0, 0, 1, 1], [], []>} : vector<128x256xbf16>, vector<256x128xbf16>, vector<128x128xf32> -> vector<128x128xf32>
    %47 = arith.truncf %40 : vector<128x128xf32> to vector<128x128xbf16>
    %c256 = arith.constant 256 : index
    %c0_21 = arith.constant 0 : index
    %48 = vector.load %arg3[%c256, %c0_21] : memref<384x128xbf16, #tpu.memory_space<vmem>>, vector<128x128xbf16>
    %cst_22 = arith.constant dense<0.000000e+00> : vector<128x128xf32>
    %49 = tpu.matmul %47, %48, %cst_22 {dimension_numbers = #tpu.dot_dimension_numbers<[1], [0], [0], [1], [0, 0, 1, 1], [], []>} : vector<128x128xbf16>, vector<128x128xbf16>, vector<128x128xf32> -> vector<128x128xf32>
    %50 = arith.addf %46, %49 : vector<128x128xf32>
    %51 = vector.broadcast %41 : vector<1x128xf32> to vector<128x128xf32>
    %52 = arith.addf %50, %51 : vector<128x128xf32>
    %cst_23 = arith.constant 0.000000e+00 : f32
    %53 = vector.broadcast %cst_23 : f32 to vector<128x128xf32>
    %54 = arith.maximumf %52, %53 : vector<128x128xf32>
    %55 = arith.truncf %54 : vector<128x128xf32> to vector<128x128xbf16>
    %c0_24 = arith.constant 0 : index
    %c0_25 = arith.constant 0 : index
    %56 = vector.load %arg4[%c0_24, %c0_25] : memref<128x384xbf16, #tpu.memory_space<vmem>>, vector<128x128xbf16>
    %cst_26 = arith.constant dense<0.000000e+00> : vector<128x128xf32>
    %57 = tpu.matmul %55, %56, %cst_26 {dimension_numbers = #tpu.dot_dimension_numbers<[1], [0], [0], [1], [0, 0, 1, 1], [], []>} : vector<128x128xbf16>, vector<128x128xbf16>, vector<128x128xf32> -> vector<128x128xf32>
    %58 = vector.broadcast %42 : vector<1x128xf32> to vector<128x128xf32>
    %59 = arith.addf %57, %58 : vector<128x128xf32>
    %cst_27 = arith.constant 0.000000e+00 : f32
    %60 = vector.broadcast %cst_27 : f32 to vector<128x128xf32>
    %61 = arith.maximumf %59, %60 : vector<128x128xf32>
    %62 = arith.truncf %61 : vector<128x128xf32> to vector<128x128xbf16>
    %c0_28 = arith.constant 0 : index
    %c128 = arith.constant 128 : index
    %63 = vector.load %arg4[%c0_28, %c128] : memref<128x384xbf16, #tpu.memory_space<vmem>>, vector<128x256xbf16>
    %cst_29 = arith.constant dense<0.000000e+00> : vector<128x256xf32>
    %64 = tpu.matmul %62, %63, %cst_29 {dimension_numbers = #tpu.dot_dimension_numbers<[1], [0], [0], [1], [0, 0, 1, 1], [], []>} : vector<128x128xbf16>, vector<128x256xbf16>, vector<128x256xf32> -> vector<128x256xf32>
    %65 = vector.broadcast %43 : vector<1x256xf32> to vector<128x256xf32>
    %66 = arith.addf %64, %65 : vector<128x256xf32>
    %67 = vector.extract_strided_slice %66 {offsets = [0, 0], sizes = [128, 128], strides = [1, 1]} : vector<128x256xf32> to vector<128x128xf32>
    %68 = vector.extract_strided_slice %66 {offsets = [0, 128], sizes = [128, 128], strides = [1, 1]} : vector<128x256xf32> to vector<128x128xf32>
    %c0_30 = arith.constant 0 : index
    %c0_31 = arith.constant 0 : index
    %69 = vector.load %arg6[%c0_30, %c0_31] : memref<128x128xf32, #tpu.memory_space<vmem>>, vector<128x128xf32>
    tpu.vector_store %arg6[%c0_30, %c0_31], %67 {strides = array<i32>} : memref<128x128xf32, #tpu.memory_space<vmem>>, vector<128x128xf32>,
    %cst_32 = arith.constant dense<0xFF800000> : vector<128xf32>
    %70 = vector.multi_reduction <maximumf>, %68, %cst_32 [1] : vector<128x128xf32> to vector<128xf32>
    %71 = vector.shape_cast %70 : vector<128xf32> to vector<128x1xf32>
    %72 = tpu.iota {dimensions = array<i32: 1>} : vector<128x128xi32>
    %73 = vector.broadcast %71 : vector<128x1xf32> to vector<128x128xf32>
    %74 = arith.cmpf oge, %68, %73 : vector<128x128xf32>
    %c128_i32 = arith.constant 128 : i32
    %75 = vector.broadcast %c128_i32 : i32 to vector<128x128xi32>
    %76 = arith.select %74, %72, %75 : vector<128x128xi1>, vector<128x128xi32>
    %cst_33 = arith.constant dense<2147483647> : vector<128xi32>
    %77 = vector.multi_reduction <minsi>, %76, %cst_33 [1] : vector<128x128xi32> to vector<128xi32>
    %78 = vector.shape_cast %77 : vector<128xi32> to vector<128x1xi32>
    %79 = vector.shape_cast %78 : vector<128x1xi32> to vector<128x1xi32>
    %80 = vector.broadcast %79 : vector<128x1xi32> to vector<128x128xi32>
    %c0_34 = arith.constant 0 : index
    %c0_35 = arith.constant 0 : index
    %81 = vector.load %arg7[%c0_34, %c0_35] : memref<128x128xi32, #tpu.memory_space<vmem>>, vector<128x128xi32>
    tpu.vector_store %arg7[%c0_34, %c0_35], %80 {strides = array<i32>} : memref<128x128xi32, #tpu.memory_space<vmem>>, vector<128x128xi32>,
    return
  }
  func.func @transform_0(%arg0: i32) -> (i32, i32) {
    %c0_i32 = arith.constant 0 : i32
    %c0_i32_0 = arith.constant 0 : i32
    return %arg0, %c0_i32 : i32, i32
  }
  func.func @transform_1(%arg0: i32) -> (i32, i32) {
    %c0_i32 = arith.constant 0 : i32
    %c0_i32_0 = arith.constant 0 : i32
    return %arg0, %c0_i32 : i32, i32
  }
  func.func @transform_2(%arg0: i32) -> (i32, i32) {
    %c0_i32 = arith.constant 0 : i32
    %c0_i32_0 = arith.constant 0 : i32
    %c0_i32_1 = arith.constant 0 : i32
    return %c0_i32, %c0_i32_0 : i32, i32
  }
  func.func @transform_3(%arg0: i32) -> (i32, i32) {
    %c0_i32 = arith.constant 0 : i32
    %c0_i32_0 = arith.constant 0 : i32
    %c0_i32_1 = arith.constant 0 : i32
    return %c0_i32, %c0_i32_0 : i32, i32
  }
  func.func @transform_4(%arg0: i32) -> (i32, i32) {
    %c0_i32 = arith.constant 0 : i32
    %c0_i32_0 = arith.constant 0 : i32
    %c0_i32_1 = arith.constant 0 : i32
    return %c0_i32, %c0_i32_0 : i32, i32
  }
  func.func @transform_5(%arg0: i32) -> (i32, i32) {
    %c0_i32 = arith.constant 0 : i32
    %c0_i32_0 = arith.constant 0 : i32
    return %arg0, %c0_i32 : i32, i32
  }
  func.func @transform_6(%arg0: i32) -> (i32, i32) {
    %c0_i32 = arith.constant 0 : i32
    %c0_i32_0 = arith.constant 0 : i32
    return %arg0, %c0_i32 : i32, i32
  }
}

</mosaic_0001>

<llo_original>
// kernel: tpu_custom_call.1
$region0: #{tpu_custom_call.1}
  #allocation0 [shape = 'u32[]', space=smem, size = 0x4, offset = 0x4, fixed_abs, tag = 'smem constant byte address 0x4 - core index']
  #allocation1 [shape = 'u32[72,128]{1,0:T(1,128)}', space=vmem, size = 0x9000, scoped, tag = 'internal scratch']
  %s0 = inlined_call_operand.hbm [shape: f32[256,256], index: 0, kind: input, shape index: {}]
  %s1 = inlined_call_operand.hbm [shape: f32[256,128], index: 1, kind: input, shape index: {}]
  %s2 = inlined_call_operand.hbm [shape: bf16[384,128], index: 2, kind: input, shape index: {}]
  %s3 = inlined_call_operand.hbm [shape: bf16[128,384], index: 3, kind: input, shape index: {}]
  %s4 = inlined_call_operand.hbm [shape: f32[8,384], index: 4, kind: input, shape index: {}]
  %s5 = inlined_call_operand.hbm [shape: f32[256,128], index: 5, kind: output, shape index: {0}]
  %s6 = inlined_call_operand.hbm [shape: s32[256,128], index: 6, kind: output, shape index: {1}]
  %7 = xla_tuple %s5, %s6
  %s8 = sld [smem:[#allocation0]]
  $region81: #{tpu_custom_call.1} parent=0
    _
  %s10 = ssub.s32 1, %s8
  %s11 = scalar_select 0, %s10, %s8
  $region1: #{tpu_custom_call.1} parent=0
    #allocation2 [shape = 'u8[262144]{0}', space=vmem, size = 0x40000, scoped, tag = 'input window, operand 0']
    #allocation3 [shape = 's32[2]{0}', space=sflag, size = 0x8, scoped, tag = 'scoped memory for tpu_custom_call.1']
    #allocation4 [shape = 's32[2]{0}', space=sflag, size = 0x8, scoped, tag = 'scoped memory for tpu_custom_call.1']
    #allocation5 [shape = 'u8[131072]{0}', space=vmem, size = 0x20000, scoped, tag = 'input window, operand 1']
    #allocation6 [shape = 's32[2]{0}', space=sflag, size = 0x8, scoped, tag = 'scoped memory for tpu_custom_call.1']
    #allocation7 [shape = 'u8[98304]{0}', space=vmem, size = 0x18000, scoped, tag = 'input window, operand 2, single buffered']
    #allocation8 [shape = 'u8[98304]{0}', space=vmem, size = 0x18000, scoped, tag = 'input window, operand 3, single buffered']
    #allocation9 [shape = 's32[1]{0}', space=sflag, size = 0x4, scoped, tag = 'scoped memory for tpu_custom_call.1']
    #allocation10 [shape = 'u8[12288]{0}', space=vmem, size = 0x3000, scoped, tag = 'input window, operand 4, single buffered']
    #allocation11 [shape = 'u8[131072]{0}', space=vmem, size = 0x20000, scoped, tag = 'output window, operand 0']
    #allocation12 [shape = 'u8[131072]{0}', space=vmem, size = 0x20000, scoped, tag = 'output window, operand 1']
    #allocation13 [shape = 's32[2]{0}', space=sflag, size = 0x8, scoped, tag = 'scoped memory for tpu_custom_call.1']
    %12 = vsyncpa [#allocation3], 0
    %s13 = scalar_lea.sflag [#allocation3], 1
    %14 = vsyncpa %s13, 0
    %15 = vsyncpa [#allocation6], 0
    %s16 = scalar_lea.sflag [#allocation6], 1
    %17 = vsyncpa %s16, 0
    %18 = vsyncpa [#allocation9], 0
    %19 = vsyncpa [#allocation4], 0
    %s20 = scalar_lea.sflag [#allocation4], 1
    %21 = vsyncpa %s20, 0
    %22 = vsyncpa [#allocation13], 0
    %s23 = scalar_lea.sflag [#allocation13], 1
    %24 = vsyncpa %s23, 0
    loop: start=0, step=1, limit=4
    $region2: #{tpu_custom_call.1} parent=1 // loop_pre_header
      _
    $region3: #{tpu_custom_call.1} parent=1 // loop_header
      %s26 = sphi 0, %s30
      %p27 = scmp.ge.s32.totalorder %s26, 4
      %s36 = sphi 0, %s38
      %s39 = sphi 0, %s36
      %s40 = sphi 0, %s39
      %s56 = sphi 0, %s40
      %s62 = sphi 0, %s64
      %s65 = sphi 0, %s62
      %s66 = sphi 0, %s65
      %s82 = sphi 0, %s66
      %s86 = sphi 0, %s86
      %s88 = sphi 0, %s86
      %s89 = sphi 0, %s88
      %s103 = sphi 0, %s89
      %s107 = sphi 0, %s107
      %s109 = sphi 0, %s107
      %s110 = sphi 0, %s109
      %s124 = sphi 0, %s110
      %s128 = sphi 0, %s128
      %s130 = sphi 0, %s128
      %s131 = sphi 0, %s130
      %s145 = sphi 0, %s131
      %s151 = sphi 0, %s153
      %s154 = sphi 0, %s151
      %s155 = sphi 0, %s154
      %s171 = sphi 0, %s155
      %s177 = sphi 0, %s179
      %s180 = sphi 0, %s177
      %s181 = sphi 0, %s180
      %s197 = sphi 0, %s181
    $region4: #{tpu_custom_call.1} parent=1 // loop_header_branch
      %29 = sbr.rel (%p27) target = $region8
    $region5: #{tpu_custom_call.1} parent=1 // loop_body
      %s31 = ssub.s32 %s26, 1
      %s32 = ssub.s32 %s26, 2
      %s33 = sadd.s32 %s26, 1
      %s34 = ssub.s32 %s26, %s33
      %p35 = scmp.eq.s32.totalorder %s34, 0
      %s37 = sadd.s32 %s36, 1
      %s38 = scalar_select %p35, %s36, %s37
      %p41 = pneg %p35
      %p42 = scmp.eq.s32.totalorder %s26, 1
      %p43 = por %p41, %p42
      %p44 = scmp.ne.s32.totalorder %s36, %s39
      %p45 = scmp.eq.s32.totalorder %s26, 0
      %p46 = por %p44, %p45
      %p47 = scmp.ne.s32.totalorder %s36, %s39
      %p48 = scmp.eq.s32.totalorder %s31, 1
      %p49 = por %p47, %p48
      %p50 = scmp.ne.s32.totalorder %s39, %s40
      %p51 = scmp.eq.s32.totalorder %s31, 0
      %p52 = por %p50, %p51
      %p53 = scmp.ne.s32.totalorder %s39, %s40
      %p54 = scmp.eq.s32.totalorder %s32, 1
      %p55 = por %p53, %p54
      %p57 = scmp.ne.s32.totalorder %s40, %s56
      %p58 = scmp.eq.s32.totalorder %s32, 0
      %p59 = por %p57, %p58
      %s60 = ssub.s32 %s26, %s33
      %p61 = scmp.eq.s32.totalorder %s60, 0
      %s63 = sadd.s32 %s62, 1
      %s64 = scalar_select %p61, %s62, %s63
      %p67 = pneg %p61
      %p68 = scmp.eq.s32.totalorder %s26, 1
      %p69 = por %p67, %p68
      %p70 = scmp.ne.s32.totalorder %s62, %s65
      %p71 = scmp.eq.s32.totalorder %s26, 0
      %p72 = por %p70, %p71
      %p73 = scmp.ne.s32.totalorder %s62, %s65
      %p74 = scmp.eq.s32.totalorder %s31, 1
      %p75 = por %p73, %p74
      %p76 = scmp.ne.s32.totalorder %s65, %s66
      %p77 = scmp.eq.s32.totalorder %s31, 0
      %p78 = por %p76, %p77
      %p79 = scmp.ne.s32.totalorder %s65, %s66
      %p80 = scmp.eq.s32.totalorder %s32, 1
      %p81 = por %p79, %p80
      %p83 = scmp.ne.s32.totalorder %s66, %s82
      %p84 = scmp.eq.s32.totalorder %s32, 0
      %p85 = por %p83, %p84
      %s87 = sadd.s32 %s86, 1
      %p90 = scmp.eq.s32.totalorder %s26, 1
      %p91 = scmp.ne.s32.totalorder %s86, %s88
      %p92 = scmp.eq.s32.totalorder %s26, 0
      %p93 = por %p91, %p92
      %p94 = scmp.ne.s32.totalorder %s86, %s88
      %p95 = scmp.eq.s32.totalorder %s31, 1
      %p96 = por %p94, %p95
      %p97 = scmp.ne.s32.totalorder %s88, %s89
      %p98 = scmp.eq.s32.totalorder %s31, 0
      %p99 = por %p97, %p98
      %p100 = scmp.ne.s32.totalorder %s88, %s89
      %p101 = scmp.eq.s32.totalorder %s32, 1
      %p102 = por %p100, %p101
      %p104 = scmp.ne.s32.totalorder %s89, %s103
      %p105 = scmp.eq.s32.totalorder %s32, 0
      %p106 = por %p104, %p105
      %s108 = sadd.s32 %s107, 1
      %p111 = scmp.eq.s32.totalorder %s26, 1
      %p112 = scmp.ne.s32.totalorder %s107, %s109
      %p113 = scmp.eq.s32.totalorder %s26, 0
      %p114 = por %p112, %p113
      %p115 = scmp.ne.s32.totalorder %s107, %s109
      %p116 = scmp.eq.s32.totalorder %s31, 1
      %p117 = por %p115, %p116
      %p118 = scmp.ne.s32.totalorder %s109, %s110
      %p119 = scmp.eq.s32.totalorder %s31, 0
      %p120 = por %p118, %p119
      %p121 = scmp.ne.s32.totalorder %s109, %s110
      %p122 = scmp.eq.s32.totalorder %s32, 1
      %p123 = por %p121, %p122
      %p125 = scmp.ne.s32.totalorder %s110, %s124
      %p126 = scmp.eq.s32.totalorder %s32, 0
      %p127 = por %p125, %p126
      %s129 = sadd.s32 %s128, 1
      %p132 = scmp.eq.s32.totalorder %s26, 1
      %p133 = scmp.ne.s32.totalorder %s128, %s130
      %p134 = scmp.eq.s32.totalorder %s26, 0
      %p135 = por %p133, %p134
      %p136 = scmp.ne.s32.totalorder %s128, %s130
      %p137 = scmp.eq.s32.totalorder %s31, 1
      %p138 = por %p136, %p137
      %p139 = scmp.ne.s32.totalorder %s130, %s131
      %p140 = scmp.eq.s32.totalorder %s31, 0
      %p141 = por %p139, %p140
      %p142 = scmp.ne.s32.totalorder %s130, %s131
      %p143 = scmp.eq.s32.totalorder %s32, 1
      %p144 = por %p142, %p143
      %p146 = scmp.ne.s32.totalorder %s131, %s145
      %p147 = scmp.eq.s32.totalorder %s32, 0
      %p148 = por %p146, %p147
      %s149 = ssub.s32 %s26, %s33
      %p150 = scmp.eq.s32.totalorder %s149, 0
      %s152 = sadd.s32 %s151, 1
      %s153 = scalar_select %p150, %s151, %s152
      %p156 = pneg %p150
      %p157 = scmp.eq.s32.totalorder %s26, 1
      %p158 = por %p156, %p157
      %p159 = scmp.ne.s32.totalorder %s151, %s154
      %p160 = scmp.eq.s32.totalorder %s26, 0
      %p161 = por %p159, %p160
      %p162 = scmp.ne.s32.totalorder %s151, %s154
      %p163 = scmp.eq.s32.totalorder %s31, 1
      %p164 = por %p162, %p163
      %p165 = scmp.ne.s32.totalorder %s154, %s155
      %p166 = scmp.eq.s32.totalorder %s31, 0
      %p167 = por %p165, %p166
      %p168 = scmp.ne.s32.totalorder %s154, %s155
      %p169 = scmp.eq.s32.totalorder %s32, 1
      %p170 = por %p168, %p169
      %p172 = scmp.ne.s32.totalorder %s155, %s171
      %p173 = scmp.eq.s32.totalorder %s32, 0
      %p174 = por %p172, %p173
      %s175 = ssub.s32 %s26, %s33
      %p176 = scmp.eq.s32.totalorder %s175, 0
      %s178 = sadd.s32 %s177, 1
      %s179 = scalar_select %p176, %s177, %s178
      %p182 = pneg %p176
      %p183 = scmp.eq.s32.totalorder %s26, 1
      %p184 = por %p182, %p183
      %p185 = scmp.ne.s32.totalorder %s177, %s180
      %p186 = scmp.eq.s32.totalorder %s26, 0
      %p187 = por %p185, %p186
      %p188 = scmp.ne.s32.totalorder %s177, %s180
      %p189 = scmp.eq.s32.totalorder %s31, 1
      %p190 = por %p188, %p189
      %p191 = scmp.ne.s32.totalorder %s180, %s181
      %p192 = scmp.eq.s32.totalorder %s31, 0
      %p193 = por %p191, %p192
      %p194 = scmp.ne.s32.totalorder %s180, %s181
      %p195 = scmp.eq.s32.totalorder %s32, 1
      %p196 = por %p194, %p195
      %p198 = scmp.ne.s32.totalorder %s181, %s197
      %p199 = scmp.eq.s32.totalorder %s32, 0
      %p200 = por %p198, %p199
      %p201 = scmp.le.s32.totalorder 1, %s26
      %p202 = scmp.lt.s32.totalorder %s26, 3
      %p203 = pnand %p201, %p202
      %p204 = pneg %p203
      // Predicated region
      $region9: #{tpu_custom_call.1} parent=5 // pred_check
        _
      $region10: #{tpu_custom_call.1} parent=5 // pred_check_branch
        %206 = sbr.rel (%p203) target = $region12
      $region11: #{tpu_custom_call.1} parent=5 // pred_region
        %s207 = ssub.s32 %s26, 1
        // Predicated region
        $region13: #{tpu_custom_call.1} parent=11 // pred_check
          %p208 = pneg %p99
        $region14: #{tpu_custom_call.1} parent=11 // pred_check_branch
          %210 = sbr.rel (%p208) target = $region16
        $region15: #{tpu_custom_call.1} parent=11 // pred_region
          %212 = vsyncadd [#allocation6], 0
          %s213 = sshll.u32 %s2, 4
          %s214 = int_to_ptr.hbm [resolvable:$true] %s213
          %s215 = sshll.u32 [#allocation7], 4
          %s216 = int_to_ptr.vmem [resolvable:$true] %s215
          %221 = dma.hbm_to_vmem [thread:$0]  %s214, 3072, %s216, [#allocation6], 64, 64, 4
        $region16: #{tpu_custom_call.1} parent=11 // pred_fallthru
          _
        // Predicated region
        $region17: #{tpu_custom_call.1} parent=11 // pred_check
          %p222 = pneg %p120
        $region18: #{tpu_custom_call.1} parent=11 // pred_check_branch
          %224 = sbr.rel (%p222) target = $region20
        $region19: #{tpu_custom_call.1} parent=11 // pred_region
          %226 = vsyncadd [#allocation9], 0
          %s227 = sshll.u32 %s3, 4
          %s228 = int_to_ptr.hbm [resolvable:$true] %s227
          %s229 = sshll.u32 [#allocation8], 4
          %s230 = int_to_ptr.vmem [resolvable:$true] %s229
          %235 = dma.hbm_to_vmem [thread:$0]  %s228, 3072, %s230, [#allocation9], 192, 192, 12
        $region20: #{tpu_custom_call.1} parent=11 // pred_fallthru
          _
        // Predicated region
        $region21: #{tpu_custom_call.1} parent=11 // pred_check
          %p236 = pneg %p141
        $region22: #{tpu_custom_call.1} parent=11 // pred_check_branch
          %238 = sbr.rel (%p236) target = $region24
        $region23: #{tpu_custom_call.1} parent=11 // pred_region
          %240 = vsyncadd [#allocation9], 0
          %s242 = sshll.u32 %s4, 4
          %s243 = int_to_ptr.hbm [resolvable:$true] %s242
          %s244 = sshll.u32 [#allocation10], 4
          %s245 = int_to_ptr.vmem [resolvable:$true] %s244
          %247 = dma.hbm_to_vmem [thread:$0]  %s243, 384, %s245, [#allocation9]
        $region24: #{tpu_custom_call.1} parent=11 // pred_fallthru
          _
      $region12: #{tpu_custom_call.1} parent=5 // pred_fallthru
        _
      %p248 = scmp.lt.s32.totalorder %s26, 2
      // Predicated region
      $region25: #{tpu_custom_call.1} parent=5 // pred_check
        %p249 = pneg %p248
      $region26: #{tpu_custom_call.1} parent=5 // pred_check_branch
        %251 = sbr.rel (%p249) target = $region28
      $region27: #{tpu_custom_call.1} parent=5 // pred_region
        // Predicated region
        $region29: #{tpu_custom_call.1} parent=27 // pred_check
          %p252 = pneg %p46
        $region30: #{tpu_custom_call.1} parent=27 // pred_check_branch
          %254 = sbr.rel (%p252) target = $region32
        $region31: #{tpu_custom_call.1} parent=27 // pred_region
          %s255 = sand.u32 %s36, 1
          %s256 = scalar_lea.sflag [#allocation3], %s255
          %s257 = sand.u32 %s36, 1
          %s258 = smul.addr %s257, 256
          %s259 = scalar_lea.vmem [#allocation2], %s258
          %s260 = smul.u32 16, %s26
          %262 = vsyncadd %s256, 0
          %s263 = smul.addr %s260, 2
          %s264 = smul.addr %s263, 8
          %s265 = scalar_lea.hbm %s0, %s264
          %s266 = sshll.u32 %s265, 4
          %s267 = int_to_ptr.hbm [resolvable:$true] %s266
          %s268 = sshll.u32 %s259, 4
          %s269 = int_to_ptr.vmem [resolvable:$true] %s268
          %274 = dma.hbm_to_vmem [thread:$0]  %s267, 4096, %s269, %s256, 256, 256, 16
        $region32: #{tpu_custom_call.1} parent=27 // pred_fallthru
          _
        // Predicated region
        $region33: #{tpu_custom_call.1} parent=27 // pred_check
          %p275 = pneg %p72
        $region34: #{tpu_custom_call.1} parent=27 // pred_check_branch
          %277 = sbr.rel (%p275) target = $region36
        $region35: #{tpu_custom_call.1} parent=27 // pred_region
          %s278 = sand.u32 %s26, 1
          %s279 = scalar_lea.sflag [#allocation6], %s278
          %s280 = sand.u32 %s62, 1
          %s281 = smul.addr %s280, 128
          %s282 = scalar_lea.vmem [#allocation5], %s281
          %s283 = smul.u32 16, %s26
          %285 = vsyncadd %s279, 0
          %s286 = smul.addr %s283, 8
          %s287 = scalar_lea.hbm %s1, %s286
          %s288 = sshll.u32 %s287, 4
          %s289 = int_to_ptr.hbm [resolvable:$true] %s288
          %s290 = sshll.u32 %s282, 4
          %s291 = int_to_ptr.vmem [resolvable:$true] %s290
          %296 = dma.hbm_to_vmem [thread:$0]  %s289, 2048, %s291, %s279, 128, 128, 8
        $region36: #{tpu_custom_call.1} parent=27 // pred_fallthru
          _
      $region28: #{tpu_custom_call.1} parent=5 // pred_fallthru
        _
      %p297 = scmp.le.s32.totalorder 1, %s26
      %p298 = scmp.lt.s32.totalorder %s26, 3
      %p299 = pnand %p297, %p298
      %p300 = pneg %p299
      // Predicated region
      $region37: #{tpu_custom_call.1} parent=5 // pred_check
        _
      $region38: #{tpu_custom_call.1} parent=5 // pred_check_branch
        %302 = sbr.rel (%p299) target = $region40
      $region39: #{tpu_custom_call.1} parent=5 // pred_region
        %s303 = ssub.s32 %s26, 1
        %s304 = sand.u32 %s39, 1
        %s305 = scalar_lea.sflag [#allocation3], %s304
        %s306 = sand.u32 %s39, 1
        %s307 = smul.addr %s306, 256
        %s308 = scalar_lea.vmem [#allocation2], %s307
        // Predicated region
        $region41: #{tpu_custom_call.1} parent=39 // pred_check
          %p309 = pneg %p52
        $region42: #{tpu_custom_call.1} parent=39 // pred_check_branch
          %311 = sbr.rel (%p309) target = $region44
        $region43: #{tpu_custom_call.1} parent=39 // pred_region
          %313 = dma.done %s305, 4096
        $region44: #{tpu_custom_call.1} parent=39 // pred_fallthru
          _
        %s314 = sand.u32 %s31, 1
        %s315 = scalar_lea.sflag [#allocation6], %s314
        %s316 = sand.u32 %s65, 1
        %s317 = smul.addr %s316, 128
        %s318 = scalar_lea.vmem [#allocation5], %s317
        // Predicated region
        $region45: #{tpu_custom_call.1} parent=39 // pred_check
          %p319 = pneg %p78
        $region46: #{tpu_custom_call.1} parent=39 // pred_check_branch
          %321 = sbr.rel (%p319) target = $region48
        $region47: #{tpu_custom_call.1} parent=39 // pred_region
          %323 = dma.done %s315, 2048
        $region48: #{tpu_custom_call.1} parent=39 // pred_fallthru
          _
        // Predicated region
        $region49: #{tpu_custom_call.1} parent=39 // pred_check
          %p324 = pneg %p99
        $region50: #{tpu_custom_call.1} parent=39 // pred_check_branch
          %326 = sbr.rel (%p324) target = $region52
        $region51: #{tpu_custom_call.1} parent=39 // pred_region
          %328 = dma.done [#allocation6], 3072
        $region52: #{tpu_custom_call.1} parent=39 // pred_fallthru
          _
        // Predicated region
        $region53: #{tpu_custom_call.1} parent=39 // pred_check
          %p329 = pneg %p120
        $region54: #{tpu_custom_call.1} parent=39 // pred_check_branch
          %331 = sbr.rel (%p329) target = $region56
        $region55: #{tpu_custom_call.1} parent=39 // pred_region
          %333 = dma.done [#allocation9], 3072
        $region56: #{tpu_custom_call.1} parent=39 // pred_fallthru
          _
        // Predicated region
        $region57: #{tpu_custom_call.1} parent=39 // pred_check
          %p334 = pneg %p141
        $region58: #{tpu_custom_call.1} parent=39 // pred_check_branch
          %336 = sbr.rel (%p334) target = $region60
        $region59: #{tpu_custom_call.1} parent=39 // pred_region
          %338 = dma.done [#allocation9], 384
        $region60: #{tpu_custom_call.1} parent=39 // pred_fallthru
          _
        %s339 = sand.u32 %s39, 1
        %s340 = scalar_lea.sflag [#allocation3], %s339
        %s341 = sand.u32 %s39, 1
        %s342 = smul.addr %s341, 256
        %s343 = scalar_lea.vmem [#allocation2], %s342
        %p344 = pneg %p52
        %p345 = pneg %p49
        %s346 = sand.u32 %s31, 1
        %s347 = scalar_lea.sflag [#allocation6], %s346
        %s348 = sand.u32 %s65, 1
        %s349 = smul.addr %s348, 128
        %s350 = scalar_lea.vmem [#allocation5], %s349
        %p351 = pneg %p78
        %p352 = pneg %p75
        %p353 = pneg %p99
        %p354 = pneg %p96
        %p355 = pneg %p120
        %p356 = pneg %p117
        %p357 = pneg %p141
        %p358 = pneg %p138
        %p359 = pneg %p167
        %p360 = pneg %p164
        %s361 = sand.u32 %s154, 1
        %s362 = scalar_lea.sflag [#allocation4], %s361
        %s363 = sand.u32 %s154, 1
        %s364 = smul.addr %s363, 128
        %s365 = scalar_lea.vmem [#allocation11], %s364
        %p366 = pneg %p193
        %p367 = pneg %p190
        %s368 = sand.u32 %s180, 1
        %s369 = scalar_lea.sflag [#allocation13], %s368
        %s370 = sand.u32 %s180, 1
        %s371 = smul.addr %s370, 128
        %s372 = scalar_lea.vmem [#allocation12], %s371
        %s373 = smul.u32 16, %s31
        %s374 = smul.u32 16, %s31
        %s375 = smul.u32 16, %s31
        %s376 = smul.u32 16, %s31
        %v377 = vld [vmem:[%s308] sm:$0xff]
        %v378 = vld [vmem:[%s308 + $0x8] sm:$0xff]
        %v379 = vld [vmem:[%s308 + $0x10] sm:$0xff]
        %v380 = vld [vmem:[%s308 + $0x18] sm:$0xff]
        %v381 = vld [vmem:[%s308 + $0x20] sm:$0xff]
        %v382 = vld [vmem:[%s308 + $0x28] sm:$0xff]
        %v383 = vld [vmem:[%s308 + $0x30] sm:$0xff]
        %v384 = vld [vmem:[%s308 + $0x38] sm:$0xff]
        %v385 = vld [vmem:[%s308 + $0x40] sm:$0xff]
        %v386 = vld [vmem:[%s308 + $0x48] sm:$0xff]
        %v387 = vld [vmem:[%s308 + $0x50] sm:$0xff]
        %v388 = vld [vmem:[%s308 + $0x58] sm:$0xff]
        %v389 = vld [vmem:[%s308 + $0x60] sm:$0xff]
        %v390 = vld [vmem:[%s308 + $0x68] sm:$0xff]
        %v391 = vld [vmem:[%s308 + $0x70] sm:$0xff]
        %v392 = vld [vmem:[%s308 + $0x78] sm:$0xff]
        %v393 = vld [vmem:[%s308 + $0x80] sm:$0xff]
        %v394 = vld [vmem:[%s308 + $0x88] sm:$0xff]
        %v395 = vld [vmem:[%s308 + $0x90] sm:$0xff]
        %v396 = vld [vmem:[%s308 + $0x98] sm:$0xff]
        %v397 = vld [vmem:[%s308 + $0xa0] sm:$0xff]
        %v398 = vld [vmem:[%s308 + $0xa8] sm:$0xff]
        %v399 = vld [vmem:[%s308 + $0xb0] sm:$0xff]
        %v400 = vld [vmem:[%s308 + $0xb8] sm:$0xff]
        %v401 = vld [vmem:[%s308 + $0xc0] sm:$0xff]
        %v402 = vld [vmem:[%s308 + $0xc8] sm:$0xff]
        %v403 = vld [vmem:[%s308 + $0xd0] sm:$0xff]
        %v404 = vld [vmem:[%s308 + $0xd8] sm:$0xff]
        %v405 = vld [vmem:[%s308 + $0xe0] sm:$0xff]
        %v406 = vld [vmem:[%s308 + $0xe8] sm:$0xff]
        %v407 = vld [vmem:[%s308 + $0xf0] sm:$0xff]
        %v408 = vld [vmem:[%s308 + $0xf8] sm:$0xff]
        %v409 = vadd.f32 %v377, %v378
        %410 = vadd.xlane.f32.xlu0 %v409
        %v411 = vpop.xlane.xlu0 %410
        %v412 = vadd.f32 %v379, %v380
        %413 = vadd.xlane.f32.xlu0 %v412
        %v414 = vpop.xlane.xlu0 %413
        %v415 = vadd.f32 %v381, %v382
        %416 = vadd.xlane.f32.xlu0 %v415
        %v417 = vpop.xlane.xlu0 %416
        %v418 = vadd.f32 %v383, %v384
        %419 = vadd.xlane.f32.xlu0 %v418
        %v420 = vpop.xlane.xlu0 %419
        %v421 = vadd.f32 %v385, %v386
        %422 = vadd.xlane.f32.xlu0 %v421
        %v423 = vpop.xlane.xlu0 %422
        %v424 = vadd.f32 %v387, %v388
        %425 = vadd.xlane.f32.xlu0 %v424
        %v426 = vpop.xlane.xlu0 %425
        %v427 = vadd.f32 %v389, %v390
        %428 = vadd.xlane.f32.xlu0 %v427
        %v429 = vpop.xlane.xlu0 %428
        %v430 = vadd.f32 %v391, %v392
        %431 = vadd.xlane.f32.xlu0 %v430
        %v432 = vpop.xlane.xlu0 %431
        %v433 = vadd.f32 %v393, %v394
        %434 = vadd.xlane.f32.xlu0 %v433
        %v435 = vpop.xlane.xlu0 %434
        %v436 = vadd.f32 %v395, %v396
        %437 = vadd.xlane.f32.xlu0 %v436
        %v438 = vpop.xlane.xlu0 %437
        %v439 = vadd.f32 %v397, %v398
        %440 = vadd.xlane.f32.xlu0 %v439
        %v441 = vpop.xlane.xlu0 %440
        %v442 = vadd.f32 %v399, %v400
        %443 = vadd.xlane.f32.xlu0 %v442
        %v444 = vpop.xlane.xlu0 %443
        %v445 = vadd.f32 %v401, %v402
        %446 = vadd.xlane.f32.xlu0 %v445
        %v447 = vpop.xlane.xlu0 %446
        %v448 = vadd.f32 %v403, %v404
        %449 = vadd.xlane.f32.xlu0 %v448
        %v450 = vpop.xlane.xlu0 %449
        %v451 = vadd.f32 %v405, %v406
        %452 = vadd.xlane.f32.xlu0 %v451
        %v453 = vpop.xlane.xlu0 %452
        %v454 = vadd.f32 %v407, %v408
        %455 = vadd.xlane.f32.xlu0 %v454
        %v456 = vpop.xlane.xlu0 %455
        %v457 = vrcp.pop 256.0
        %v458 = vmul.f32 256.0, %v457
        %v459 = vsub.f32 1.0, %v458
        %v460 = vmul.f32 %v457, %v459
        %v461 = vadd.f32 %v457, %v460
        %vm462 = vweird.f32 %v457
        %v463 = vsel %vm462, %v457, %v461
        %v464 = vmul.f32 %v411, %v463
        %v465 = vmul.f32 %v414, %v463
        %v466 = vmul.f32 %v417, %v463
        %v467 = vmul.f32 %v420, %v463
        %v468 = vmul.f32 %v423, %v463
        %v469 = vmul.f32 %v426, %v463
        %v470 = vmul.f32 %v429, %v463
        %v471 = vmul.f32 %v432, %v463
        %v472 = vmul.f32 %v435, %v463
        %v473 = vmul.f32 %v438, %v463
        %v474 = vmul.f32 %v441, %v463
        %v475 = vmul.f32 %v444, %v463
        %v476 = vmul.f32 %v447, %v463
        %v477 = vmul.f32 %v450, %v463
        %v478 = vmul.f32 %v453, %v463
        %v479 = vmul.f32 %v456, %v463
        %v480 = vsub.f32 %v377, %v464
        %v481 = vsub.f32 %v378, %v464
        %v482 = vsub.f32 %v379, %v465
        %v483 = vsub.f32 %v380, %v465
        %v484 = vsub.f32 %v381, %v466
        %v485 = vsub.f32 %v382, %v466
        %v486 = vsub.f32 %v383, %v467
        %v487 = vsub.f32 %v384, %v467
        %v488 = vsub.f32 %v385, %v468
        %v489 = vsub.f32 %v386, %v468
        %v490 = vsub.f32 %v387, %v469
        %v491 = vsub.f32 %v388, %v469
        %v492 = vsub.f32 %v389, %v470
        %v493 = vsub.f32 %v390, %v470
        %v494 = vsub.f32 %v391, %v471
        %v495 = vsub.f32 %v392, %v471
        %v496 = vsub.f32 %v393, %v472
        %v497 = vsub.f32 %v394, %v472
        %v498 = vsub.f32 %v395, %v473
        %v499 = vsub.f32 %v396, %v473
        %v500 = vsub.f32 %v397, %v474
        %v501 = vsub.f32 %v398, %v474
        %v502 = vsub.f32 %v399, %v475
        %v503 = vsub.f32 %v400, %v475
        %v504 = vsub.f32 %v401, %v476
        %v505 = vsub.f32 %v402, %v476
        %v506 = vsub.f32 %v403, %v477
        %v507 = vsub.f32 %v404, %v477
        %v508 = vsub.f32 %v405, %v478
        %v509 = vsub.f32 %v406, %v478
        %v510 = vsub.f32 %v407, %v479
        %v511 = vsub.f32 %v408, %v479
        %v512 = vmul.f32 %v480, %v480
        %v513 = vmul.f32 %v481, %v481
        %v514 = vmul.f32 %v482, %v482
        %v515 = vmul.f32 %v483, %v483
        %v516 = vmul.f32 %v484, %v484
        %v517 = vmul.f32 %v485, %v485
        %v518 = vmul.f32 %v486, %v486
        %v519 = vmul.f32 %v487, %v487
        %v520 = vmul.f32 %v488, %v488
        %v521 = vmul.f32 %v489, %v489
        %v522 = vmul.f32 %v490, %v490
        %v523 = vmul.f32 %v491, %v491
        %v524 = vmul.f32 %v492, %v492
        %v525 = vmul.f32 %v493, %v493
        %v526 = vmul.f32 %v494, %v494
        %v527 = vmul.f32 %v495, %v495
        %v528 = vmul.f32 %v496, %v496
        %v529 = vmul.f32 %v497, %v497
        %v530 = vmul.f32 %v498, %v498
        %v531 = vmul.f32 %v499, %v499
        %v532 = vmul.f32 %v500, %v500
        %v533 = vmul.f32 %v501, %v501
        %v534 = vmul.f32 %v502, %v502
        %v535 = vmul.f32 %v503, %v503
        %v536 = vmul.f32 %v504, %v504
        %v537 = vmul.f32 %v505, %v505
        %v538 = vmul.f32 %v506, %v506
        %v539 = vmul.f32 %v507, %v507
        %v540 = vmul.f32 %v508, %v508
        %v541 = vmul.f32 %v509, %v509
        %v542 = vmul.f32 %v510, %v510
        %v543 = vmul.f32 %v511, %v511
        %v544 = vadd.f32 %v512, %v513
        %545 = vadd.xlane.f32.xlu0 %v544
        %v546 = vpop.xlane.xlu0 %545
        %v547 = vadd.f32 %v514, %v515
        %548 = vadd.xlane.f32.xlu0 %v547
        %v549 = vpop.xlane.xlu0 %548
        %v550 = vadd.f32 %v516, %v517
        %551 = vadd.xlane.f32.xlu0 %v550
        %v552 = vpop.xlane.xlu0 %551
        %v553 = vadd.f32 %v518, %v519
        %554 = vadd.xlane.f32.xlu0 %v553
        %v555 = vpop.xlane.xlu0 %554
        %v556 = vadd.f32 %v520, %v521
        %557 = vadd.xlane.f32.xlu0 %v556
        %v558 = vpop.xlane.xlu0 %557
        %v559 = vadd.f32 %v522, %v523
        %560 = vadd.xlane.f32.xlu0 %v559
        %v561 = vpop.xlane.xlu0 %560
        %v562 = vadd.f32 %v524, %v525
        %563 = vadd.xlane.f32.xlu0 %v562
        %v564 = vpop.xlane.xlu0 %563
        %v565 = vadd.f32 %v526, %v527
        %566 = vadd.xlane.f32.xlu0 %v565
        %v567 = vpop.xlane.xlu0 %566
        %v568 = vadd.f32 %v528, %v529
        %569 = vadd.xlane.f32.xlu0 %v568
        %v570 = vpop.xlane.xlu0 %569
        %v571 = vadd.f32 %v530, %v531
        %572 = vadd.xlane.f32.xlu0 %v571
        %v573 = vpop.xlane.xlu0 %572
        %v574 = vadd.f32 %v532, %v533
        %575 = vadd.xlane.f32.xlu0 %v574
        %v576 = vpop.xlane.xlu0 %575
        %v577 = vadd.f32 %v534, %v535
        %578 = vadd.xlane.f32.xlu0 %v577
        %v579 = vpop.xlane.xlu0 %578
        %v580 = vadd.f32 %v536, %v537
        %581 = vadd.xlane.f32.xlu0 %v580
        %v582 = vpop.xlane.xlu0 %581
        %v583 = vadd.f32 %v538, %v539
        %584 = vadd.xlane.f32.xlu0 %v583
        %v585 = vpop.xlane.xlu0 %584
        %v586 = vadd.f32 %v540, %v541
        %587 = vadd.xlane.f32.xlu0 %v586
        %v588 = vpop.xlane.xlu0 %587
        %v589 = vadd.f32 %v542, %v543
        %590 = vadd.xlane.f32.xlu0 %v589
        %v591 = vpop.xlane.xlu0 %590
        %v592 = vmul.f32 %v546, %v463
        %v593 = vmul.f32 %v549, %v463
        %v594 = vmul.f32 %v552, %v463
        %v595 = vmul.f32 %v555, %v463
        %v596 = vmul.f32 %v558, %v463
        %v597 = vmul.f32 %v561, %v463
        %v598 = vmul.f32 %v564, %v463
        %v599 = vmul.f32 %v567, %v463
        %v600 = vmul.f32 %v570, %v463
        %v601 = vmul.f32 %v573, %v463
        %v602 = vmul.f32 %v576, %v463
        %v603 = vmul.f32 %v579, %v463
        %v604 = vmul.f32 %v582, %v463
        %v605 = vmul.f32 %v585, %v463
        %v606 = vmul.f32 %v588, %v463
        %v607 = vmul.f32 %v591, %v463
        %v608 = vadd.f32 %v592, 1e-05
        %v609 = vadd.f32 %v593, 1e-05
        %v610 = vadd.f32 %v594, 1e-05
        %v611 = vadd.f32 %v595, 1e-05
        %v612 = vadd.f32 %v596, 1e-05
        %v613 = vadd.f32 %v597, 1e-05
        %v614 = vadd.f32 %v598, 1e-05
        %v615 = vadd.f32 %v599, 1e-05
        %v616 = vadd.f32 %v600, 1e-05
        %v617 = vadd.f32 %v601, 1e-05
        %v618 = vadd.f32 %v602, 1e-05
        %v619 = vadd.f32 %v603, 1e-05
        %v620 = vadd.f32 %v604, 1e-05
        %v621 = vadd.f32 %v605, 1e-05
        %v622 = vadd.f32 %v606, 1e-05
        %v623 = vadd.f32 %v607, 1e-05
        %v624 = vrsqrt.pop %v608
        %v625 = vmul.f32 %v624, %v608
        %v626 = vmul.f32 %v625, %v624
        %v627 = vmul.f32 0.5, %v626
        %v628 = vsub.f32 1.5, %v627
        %v629 = vmul.f32 %v624, %v628
        %vm630 = vweird.f32 %v608
        %vm631 = vweird.f32 %v624
        %vm632 = vmor %vm630, %vm631
        %v633 = vsel %vm632, %v624, %v629
        %v634 = vrsqrt.pop %v609
        %v635 = vmul.f32 %v634, %v609
        %v636 = vmul.f32 %v635, %v634
        %v637 = vmul.f32 0.5, %v636
        %v638 = vsub.f32 1.5, %v637
        %v639 = vmul.f32 %v634, %v638
        %vm640 = vweird.f32 %v609
        %vm641 = vweird.f32 %v634
        %vm642 = vmor %vm640, %vm641
        %v643 = vsel %vm642, %v634, %v639
        %v644 = vrsqrt.pop %v610
        %v645 = vmul.f32 %v644, %v610
        %v646 = vmul.f32 %v645, %v644
        %v647 = vmul.f32 0.5, %v646
        %v648 = vsub.f32 1.5, %v647
        %v649 = vmul.f32 %v644, %v648
        %vm650 = vweird.f32 %v610
        %vm651 = vweird.f32 %v644
        %vm652 = vmor %vm650, %vm651
        %v653 = vsel %vm652, %v644, %v649
        %v654 = vrsqrt.pop %v611
        %v655 = vmul.f32 %v654, %v611
        %v656 = vmul.f32 %v655, %v654
        %v657 = vmul.f32 0.5, %v656
        %v658 = vsub.f32 1.5, %v657
        %v659 = vmul.f32 %v654, %v658
        %vm660 = vweird.f32 %v611
        %vm661 = vweird.f32 %v654
        %vm662 = vmor %vm660, %vm661
        %v663 = vsel %vm662, %v654, %v659
        %v664 = vrsqrt.pop %v612
        %v665 = vmul.f32 %v664, %v612
        %v666 = vmul.f32 %v665, %v664
        %v667 = vmul.f32 0.5, %v666
        %v668 = vsub.f32 1.5, %v667
        %v669 = vmul.f32 %v664, %v668
        %vm670 = vweird.f32 %v612
        %vm671 = vweird.f32 %v664
        %vm672 = vmor %vm670, %vm671
        %v673 = vsel %vm672, %v664, %v669
        %v674 = vrsqrt.pop %v613
        %v675 = vmul.f32 %v674, %v613
        %v676 = vmul.f32 %v675, %v674
        %v677 = vmul.f32 0.5, %v676
        %v678 = vsub.f32 1.5, %v677
        %v679 = vmul.f32 %v674, %v678
        %vm680 = vweird.f32 %v613
        %vm681 = vweird.f32 %v674
        %vm682 = vmor %vm680, %vm681
        %v683 = vsel %vm682, %v674, %v679
        %v684 = vrsqrt.pop %v614
        %v685 = vmul.f32 %v684, %v614
        %v686 = vmul.f32 %v685, %v684
        %v687 = vmul.f32 0.5, %v686
        %v688 = vsub.f32 1.5, %v687
        %v689 = vmul.f32 %v684, %v688
        %vm690 = vweird.f32 %v614
        %vm691 = vweird.f32 %v684
        %vm692 = vmor %vm690, %vm691
        %v693 = vsel %vm692, %v684, %v689
        %v694 = vrsqrt.pop %v615
        %v695 = vmul.f32 %v694, %v615
        %v696 = vmul.f32 %v695, %v694
        %v697 = vmul.f32 0.5, %v696
        %v698 = vsub.f32 1.5, %v697
        %v699 = vmul.f32 %v694, %v698
        %vm700 = vweird.f32 %v615
        %vm701 = vweird.f32 %v694
        %vm702 = vmor %vm700, %vm701
        %v703 = vsel %vm702, %v694, %v699
        %v704 = vrsqrt.pop %v616
        %v705 = vmul.f32 %v704, %v616
        %v706 = vmul.f32 %v705, %v704
        %v707 = vmul.f32 0.5, %v706
        %v708 = vsub.f32 1.5, %v707
        %v709 = vmul.f32 %v704, %v708
        %vm710 = vweird.f32 %v616
        %vm711 = vweird.f32 %v704
        %vm712 = vmor %vm710, %vm711
        %v713 = vsel %vm712, %v704, %v709
        %v714 = vrsqrt.pop %v617
        %v715 = vmul.f32 %v714, %v617
        %v716 = vmul.f32 %v715, %v714
        %v717 = vmul.f32 0.5, %v716
        %v718 = vsub.f32 1.5, %v717
        %v719 = vmul.f32 %v714, %v718
        %vm720 = vweird.f32 %v617
        %vm721 = vweird.f32 %v714
        %vm722 = vmor %vm720, %vm721
        %v723 = vsel %vm722, %v714, %v719
        %v724 = vrsqrt.pop %v618
        %v725 = vmul.f32 %v724, %v618
        %v726 = vmul.f32 %v725, %v724
        %v727 = vmul.f32 0.5, %v726
        %v728 = vsub.f32 1.5, %v727
        %v729 = vmul.f32 %v724, %v728
        %vm730 = vweird.f32 %v618
        %vm731 = vweird.f32 %v724
        %vm732 = vmor %vm730, %vm731
        %v733 = vsel %vm732, %v724, %v729
        %v734 = vrsqrt.pop %v619
        %v735 = vmul.f32 %v734, %v619
        %v736 = vmul.f32 %v735, %v734
        %v737 = vmul.f32 0.5, %v736
        %v738 = vsub.f32 1.5, %v737
        %v739 = vmul.f32 %v734, %v738
        %vm740 = vweird.f32 %v619
        %vm741 = vweird.f32 %v734
        %vm742 = vmor %vm740, %vm741
        %v743 = vsel %vm742, %v734, %v739
        %v744 = vrsqrt.pop %v620
        %v745 = vmul.f32 %v744, %v620
        %v746 = vmul.f32 %v745, %v744
        %v747 = vmul.f32 0.5, %v746
        %v748 = vsub.f32 1.5, %v747
        %v749 = vmul.f32 %v744, %v748
        %vm750 = vweird.f32 %v620
        %vm751 = vweird.f32 %v744
        %vm752 = vmor %vm750, %vm751
        %v753 = vsel %vm752, %v744, %v749
        %v754 = vrsqrt.pop %v621
        %v755 = vmul.f32 %v754, %v621
        %v756 = vmul.f32 %v755, %v754
        %v757 = vmul.f32 0.5, %v756
        %v758 = vsub.f32 1.5, %v757
        %v759 = vmul.f32 %v754, %v758
        %vm760 = vweird.f32 %v621
        %vm761 = vweird.f32 %v754
        %vm762 = vmor %vm760, %vm761
        %v763 = vsel %vm762, %v754, %v759
        %v764 = vrsqrt.pop %v622
        %v765 = vmul.f32 %v764, %v622
        %v766 = vmul.f32 %v765, %v764
        %v767 = vmul.f32 0.5, %v766
        %v768 = vsub.f32 1.5, %v767
        %v769 = vmul.f32 %v764, %v768
        %vm770 = vweird.f32 %v622
        %vm771 = vweird.f32 %v764
        %vm772 = vmor %vm770, %vm771
        %v773 = vsel %vm772, %v764, %v769
        %v774 = vrsqrt.pop %v623
        %v775 = vmul.f32 %v774, %v623
        %v776 = vmul.f32 %v775, %v774
        %v777 = vmul.f32 0.5, %v776
        %v778 = vsub.f32 1.5, %v777
        %v779 = vmul.f32 %v774, %v778
        %vm780 = vweird.f32 %v623
        %vm781 = vweird.f32 %v774
        %vm782 = vmor %vm780, %vm781
        %v783 = vsel %vm782, %v774, %v779
        %v784 = vmul.f32 %v480, %v633
        %v785 = vmul.f32 %v481, %v633
        %v786 = vmul.f32 %v482, %v643
        %v787 = vmul.f32 %v483, %v643
        %v788 = vmul.f32 %v484, %v653
        %v789 = vmul.f32 %v485, %v653
        %v790 = vmul.f32 %v486, %v663
        %v791 = vmul.f32 %v487, %v663
        %v792 = vmul.f32 %v488, %v673
        %v793 = vmul.f32 %v489, %v673
        %v794 = vmul.f32 %v490, %v683
        %v795 = vmul.f32 %v491, %v683
        %v796 = vmul.f32 %v492, %v693
        %v797 = vmul.f32 %v493, %v693
        %v798 = vmul.f32 %v494, %v703
        %v799 = vmul.f32 %v495, %v703
        %v800 = vmul.f32 %v496, %v713
        %v801 = vmul.f32 %v497, %v713
        %v802 = vmul.f32 %v498, %v723
        %v803 = vmul.f32 %v499, %v723
        %v804 = vmul.f32 %v500, %v733
        %v805 = vmul.f32 %v501, %v733
        %v806 = vmul.f32 %v502, %v743
        %v807 = vmul.f32 %v503, %v743
        %v808 = vmul.f32 %v504, %v753
        %v809 = vmul.f32 %v505, %v753
        %v810 = vmul.f32 %v506, %v763
        %v811 = vmul.f32 %v507, %v763
        %v812 = vmul.f32 %v508, %v773
        %v813 = vmul.f32 %v509, %v773
        %v814 = vmul.f32 %v510, %v783
        %v815 = vmul.f32 %v511, %v783
        %v816 = vld [vmem:[%s318] sm:$0xff]
        %v817 = vld [vmem:[%s318 + $0x8] sm:$0xff]
        %v818 = vld [vmem:[%s318 + $0x10] sm:$0xff]
        %v819 = vld [vmem:[%s318 + $0x18] sm:$0xff]
        %v820 = vld [vmem:[%s318 + $0x20] sm:$0xff]
        %v821 = vld [vmem:[%s318 + $0x28] sm:$0xff]
        %v822 = vld [vmem:[%s318 + $0x30] sm:$0xff]
        %v823 = vld [vmem:[%s318 + $0x38] sm:$0xff]
        %v824 = vld [vmem:[%s318 + $0x40] sm:$0xff]
        %v825 = vld [vmem:[%s318 + $0x48] sm:$0xff]
        %v826 = vld [vmem:[%s318 + $0x50] sm:$0xff]
        %v827 = vld [vmem:[%s318 + $0x58] sm:$0xff]
        %v828 = vld [vmem:[%s318 + $0x60] sm:$0xff]
        %v829 = vld [vmem:[%s318 + $0x68] sm:$0xff]
        %v830 = vld [vmem:[%s318 + $0x70] sm:$0xff]
        %v831 = vld [vmem:[%s318 + $0x78] sm:$0xff]
        %v832 = vlaneseq
        %v833 = vand.u32 %v832, 127
        %vm834 = vcmp.lt.s32.totalorder %v833, 32
        %v835 = vsel %vm834, %v816, 0.0
        %v836 = vsel %vm834, %v817, 0.0
        %v837 = vsel %vm834, %v818, 0.0
        %v838 = vsel %vm834, %v819, 0.0
        %v839 = vsel %vm834, %v820, 0.0
        %v840 = vsel %vm834, %v821, 0.0
        %v841 = vsel %vm834, %v822, 0.0
        %v842 = vsel %vm834, %v823, 0.0
        %v843 = vsel %vm834, %v824, 0.0
        %v844 = vsel %vm834, %v825, 0.0
        %v845 = vsel %vm834, %v826, 0.0
        %v846 = vsel %vm834, %v827, 0.0
        %v847 = vsel %vm834, %v828, 0.0
        %v848 = vsel %vm834, %v829, 0.0
        %v849 = vsel %vm834, %v830, 0.0
        %v850 = vsel %vm834, %v831, 0.0
        %851 = vadd.xlane.f32.xlu0 %v835
        %v852 = vpop.xlane.xlu0 %851
        %853 = vadd.xlane.f32.xlu0 %v836
        %v854 = vpop.xlane.xlu0 %853
        %855 = vadd.xlane.f32.xlu0 %v837
        %v856 = vpop.xlane.xlu0 %855
        %857 = vadd.xlane.f32.xlu0 %v838
        %v858 = vpop.xlane.xlu0 %857
        %859 = vadd.xlane.f32.xlu0 %v839
        %v860 = vpop.xlane.xlu0 %859
        %861 = vadd.xlane.f32.xlu0 %v840
        %v862 = vpop.xlane.xlu0 %861
        %863 = vadd.xlane.f32.xlu0 %v841
        %v864 = vpop.xlane.xlu0 %863
        %865 = vadd.xlane.f32.xlu0 %v842
        %v866 = vpop.xlane.xlu0 %865
        %867 = vadd.xlane.f32.xlu0 %v843
        %v868 = vpop.xlane.xlu0 %867
        %869 = vadd.xlane.f32.xlu0 %v844
        %v870 = vpop.xlane.xlu0 %869
        %871 = vadd.xlane.f32.xlu0 %v845
        %v872 = vpop.xlane.xlu0 %871
        %873 = vadd.xlane.f32.xlu0 %v846
        %v874 = vpop.xlane.xlu0 %873
        %875 = vadd.xlane.f32.xlu0 %v847
        %v876 = vpop.xlane.xlu0 %875
        %877 = vadd.xlane.f32.xlu0 %v848
        %v878 = vpop.xlane.xlu0 %877
        %879 = vadd.xlane.f32.xlu0 %v849
        %v880 = vpop.xlane.xlu0 %879
        %881 = vadd.xlane.f32.xlu0 %v850
        %v882 = vpop.xlane.xlu0 %881
        %v883 = vmul.f32 %v852, 0.03125
        %v884 = vmul.f32 %v854, 0.03125
        %v885 = vmul.f32 %v856, 0.03125
        %v886 = vmul.f32 %v858, 0.03125
        %v887 = vmul.f32 %v860, 0.03125
        %v888 = vmul.f32 %v862, 0.03125
        %v889 = vmul.f32 %v864, 0.03125
        %v890 = vmul.f32 %v866, 0.03125
        %v891 = vmul.f32 %v868, 0.03125
        %v892 = vmul.f32 %v870, 0.03125
        %v893 = vmul.f32 %v872, 0.03125
        %v894 = vmul.f32 %v874, 0.03125
        %v895 = vmul.f32 %v876, 0.03125
        %v896 = vmul.f32 %v878, 0.03125
        %v897 = vmul.f32 %v880, 0.03125
        %v898 = vmul.f32 %v882, 0.03125
        %v899 = vsub.f32 %v816, %v883
        %v900 = vsub.f32 %v817, %v884
        %v901 = vsub.f32 %v818, %v885
        %v902 = vsub.f32 %v819, %v886
        %v903 = vsub.f32 %v820, %v887
        %v904 = vsub.f32 %v821, %v888
        %v905 = vsub.f32 %v822, %v889
        %v906 = vsub.f32 %v823, %v890
        %v907 = vsub.f32 %v824, %v891
        %v908 = vsub.f32 %v825, %v892
        %v909 = vsub.f32 %v826, %v893
        %v910 = vsub.f32 %v827, %v894
        %v911 = vsub.f32 %v828, %v895
        %v912 = vsub.f32 %v829, %v896
        %v913 = vsub.f32 %v830, %v897
        %v914 = vsub.f32 %v831, %v898
        %v915 = vsel %vm834, %v899, 0.0
        %v916 = vsel %vm834, %v900, 0.0
        %v917 = vsel %vm834, %v901, 0.0
        %v918 = vsel %vm834, %v902, 0.0
        %v919 = vsel %vm834, %v903, 0.0
        %v920 = vsel %vm834, %v904, 0.0
        %v921 = vsel %vm834, %v905, 0.0
        %v922 = vsel %vm834, %v906, 0.0
        %v923 = vsel %vm834, %v907, 0.0
        %v924 = vsel %vm834, %v908, 0.0
        %v925 = vsel %vm834, %v909, 0.0
        %v926 = vsel %vm834, %v910, 0.0
        %v927 = vsel %vm834, %v911, 0.0
        %v928 = vsel %vm834, %v912, 0.0
        %v929 = vsel %vm834, %v913, 0.0
        %v930 = vsel %vm834, %v914, 0.0
        %v931 = vmul.f32 %v915, %v915
        %v932 = vmul.f32 %v916, %v916
        %v933 = vmul.f32 %v917, %v917
        %v934 = vmul.f32 %v918, %v918
        %v935 = vmul.f32 %v919, %v919
        %v936 = vmul.f32 %v920, %v920
        %v937 = vmul.f32 %v921, %v921
        %v938 = vmul.f32 %v922, %v922
        %v939 = vmul.f32 %v923, %v923
        %v940 = vmul.f32 %v924, %v924
        %v941 = vmul.f32 %v925, %v925
        %v942 = vmul.f32 %v926, %v926
        %v943 = vmul.f32 %v927, %v927
        %v944 = vmul.f32 %v928, %v928
        %v945 = vmul.f32 %v929, %v929
        %v946 = vmul.f32 %v930, %v930
        %947 = vadd.xlane.f32.xlu0 %v931
        %v948 = vpop.xlane.xlu0 %947
        %949 = vadd.xlane.f32.xlu0 %v932
        %v950 = vpop.xlane.xlu0 %949
        %951 = vadd.xlane.f32.xlu0 %v933
        %v952 = vpop.xlane.xlu0 %951
        %953 = vadd.xlane.f32.xlu0 %v934
        %v954 = vpop.xlane.xlu0 %953
        %955 = vadd.xlane.f32.xlu0 %v935
        %v956 = vpop.xlane.xlu0 %955
        %957 = vadd.xlane.f32.xlu0 %v936
        %v958 = vpop.xlane.xlu0 %957
        %959 = vadd.xlane.f32.xlu0 %v937
        %v960 = vpop.xlane.xlu0 %959
        %961 = vadd.xlane.f32.xlu0 %v938
        %v962 = vpop.xlane.xlu0 %961
        %963 = vadd.xlane.f32.xlu0 %v939
        %v964 = vpop.xlane.xlu0 %963
        %965 = vadd.xlane.f32.xlu0 %v940
        %v966 = vpop.xlane.xlu0 %965
        %967 = vadd.xlane.f32.xlu0 %v941
        %v968 = vpop.xlane.xlu0 %967
        %969 = vadd.xlane.f32.xlu0 %v942
        %v970 = vpop.xlane.xlu0 %969
        %971 = vadd.xlane.f32.xlu0 %v943
        %v972 = vpop.xlane.xlu0 %971
        %973 = vadd.xlane.f32.xlu0 %v944
        %v974 = vpop.xlane.xlu0 %973
        %975 = vadd.xlane.f32.xlu0 %v945
        %v976 = vpop.xlane.xlu0 %975
        %977 = vadd.xlane.f32.xlu0 %v946
        %v978 = vpop.xlane.xlu0 %977
        %v979 = vmul.f32 %v948, 0.03125
        %v980 = vmul.f32 %v950, 0.03125
        %v981 = vmul.f32 %v952, 0.03125
        %v982 = vmul.f32 %v954, 0.03125
        %v983 = vmul.f32 %v956, 0.03125
        %v984 = vmul.f32 %v958, 0.03125
        %v985 = vmul.f32 %v960, 0.03125
        %v986 = vmul.f32 %v962, 0.03125
        %v987 = vmul.f32 %v964, 0.03125
        %v988 = vmul.f32 %v966, 0.03125
        %v989 = vmul.f32 %v968, 0.03125
        %v990 = vmul.f32 %v970, 0.03125
        %v991 = vmul.f32 %v972, 0.03125
        %v992 = vmul.f32 %v974, 0.03125
        %v993 = vmul.f32 %v976, 0.03125
        %v994 = vmul.f32 %v978, 0.03125
        %v995 = vadd.f32 %v979, 1e-05
        %v996 = vadd.f32 %v980, 1e-05
        %v997 = vadd.f32 %v981, 1e-05
        %v998 = vadd.f32 %v982, 1e-05
        %v999 = vadd.f32 %v983, 1e-05
        %v1000 = vadd.f32 %v984, 1e-05
        %v1001 = vadd.f32 %v985, 1e-05
        %v1002 = vadd.f32 %v986, 1e-05
        %v1003 = vadd.f32 %v987, 1e-05
        %v1004 = vadd.f32 %v988, 1e-05
        %v1005 = vadd.f32 %v989, 1e-05
        %v1006 = vadd.f32 %v990, 1e-05
        %v1007 = vadd.f32 %v991, 1e-05
        %v1008 = vadd.f32 %v992, 1e-05
        %v1009 = vadd.f32 %v993, 1e-05
        %v1010 = vadd.f32 %v994, 1e-05
        %v1011 = vrsqrt.pop %v995
        %v1012 = vmul.f32 %v1011, %v995
        %v1013 = vmul.f32 %v1012, %v1011
        %v1014 = vmul.f32 0.5, %v1013
        %v1015 = vsub.f32 1.5, %v1014
        %v1016 = vmul.f32 %v1011, %v1015
        %vm1017 = vweird.f32 %v995
        %vm1018 = vweird.f32 %v1011
        %vm1019 = vmor %vm1017, %vm1018
        %v1020 = vsel %vm1019, %v1011, %v1016
        %v1021 = vrsqrt.pop %v996
        %v1022 = vmul.f32 %v1021, %v996
        %v1023 = vmul.f32 %v1022, %v1021
        %v1024 = vmul.f32 0.5, %v1023
        %v1025 = vsub.f32 1.5, %v1024
        %v1026 = vmul.f32 %v1021, %v1025
        %vm1027 = vweird.f32 %v996
        %vm1028 = vweird.f32 %v1021
        %vm1029 = vmor %vm1027, %vm1028
        %v1030 = vsel %vm1029, %v1021, %v1026
        %v1031 = vrsqrt.pop %v997
        %v1032 = vmul.f32 %v1031, %v997
        %v1033 = vmul.f32 %v1032, %v1031
        %v1034 = vmul.f32 0.5, %v1033
        %v1035 = vsub.f32 1.5, %v1034
        %v1036 = vmul.f32 %v1031, %v1035
        %vm1037 = vweird.f32 %v997
        %vm1038 = vweird.f32 %v1031
        %vm1039 = vmor %vm1037, %vm1038
        %v1040 = vsel %vm1039, %v1031, %v1036
        %v1041 = vrsqrt.pop %v998
        %v1042 = vmul.f32 %v1041, %v998
        %v1043 = vmul.f32 %v1042, %v1041
        %v1044 = vmul.f32 0.5, %v1043
        %v1045 = vsub.f32 1.5, %v1044
        %v1046 = vmul.f32 %v1041, %v1045
        %vm1047 = vweird.f32 %v998
        %vm1048 = vweird.f32 %v1041
        %vm1049 = vmor %vm1047, %vm1048
        %v1050 = vsel %vm1049, %v1041, %v1046
        %v1051 = vrsqrt.pop %v999
        %v1052 = vmul.f32 %v1051, %v999
        %v1053 = vmul.f32 %v1052, %v1051
        %v1054 = vmul.f32 0.5, %v1053
        %v1055 = vsub.f32 1.5, %v1054
        %v1056 = vmul.f32 %v1051, %v1055
        %vm1057 = vweird.f32 %v999
        %vm1058 = vweird.f32 %v1051
        %vm1059 = vmor %vm1057, %vm1058
        %v1060 = vsel %vm1059, %v1051, %v1056
        %v1061 = vrsqrt.pop %v1000
        %v1062 = vmul.f32 %v1061, %v1000
        %v1063 = vmul.f32 %v1062, %v1061
        %v1064 = vmul.f32 0.5, %v1063
        %v1065 = vsub.f32 1.5, %v1064
        %v1066 = vmul.f32 %v1061, %v1065
        %vm1067 = vweird.f32 %v1000
        %vm1068 = vweird.f32 %v1061
        %vm1069 = vmor %vm1067, %vm1068
        %v1070 = vsel %vm1069, %v1061, %v1066
        %v1071 = vrsqrt.pop %v1001
        %v1072 = vmul.f32 %v1071, %v1001
        %v1073 = vmul.f32 %v1072, %v1071
        %v1074 = vmul.f32 0.5, %v1073
        %v1075 = vsub.f32 1.5, %v1074
        %v1076 = vmul.f32 %v1071, %v1075
        %vm1077 = vweird.f32 %v1001
        %vm1078 = vweird.f32 %v1071
        %vm1079 = vmor %vm1077, %vm1078
        %v1080 = vsel %vm1079, %v1071, %v1076
        %v1081 = vrsqrt.pop %v1002
        %v1082 = vmul.f32 %v1081, %v1002
        %v1083 = vmul.f32 %v1082, %v1081
        %v1084 = vmul.f32 0.5, %v1083
        %v1085 = vsub.f32 1.5, %v1084
        %v1086 = vmul.f32 %v1081, %v1085
        %vm1087 = vweird.f32 %v1002
        %vm1088 = vweird.f32 %v1081
        %vm1089 = vmor %vm1087, %vm1088
        %v1090 = vsel %vm1089, %v1081, %v1086
        %v1091 = vrsqrt.pop %v1003
        %v1092 = vmul.f32 %v1091, %v1003
        %v1093 = vmul.f32 %v1092, %v1091
        %v1094 = vmul.f32 0.5, %v1093
        %v1095 = vsub.f32 1.5, %v1094
        %v1096 = vmul.f32 %v1091, %v1095
        %vm1097 = vweird.f32 %v1003
        %vm1098 = vweird.f32 %v1091
        %vm1099 = vmor %vm1097, %vm1098
        %v1100 = vsel %vm1099, %v1091, %v1096
        %v1101 = vrsqrt.pop %v1004
        %v1102 = vmul.f32 %v1101, %v1004
        %v1103 = vmul.f32 %v1102, %v1101
        %v1104 = vmul.f32 0.5, %v1103
        %v1105 = vsub.f32 1.5, %v1104
        %v1106 = vmul.f32 %v1101, %v1105
        %vm1107 = vweird.f32 %v1004
        %vm1108 = vweird.f32 %v1101
        %vm1109 = vmor %vm1107, %vm1108
        %v1110 = vsel %vm1109, %v1101, %v1106
        %v1111 = vrsqrt.pop %v1005
        %v1112 = vmul.f32 %v1111, %v1005
        %v1113 = vmul.f32 %v1112, %v1111
        %v1114 = vmul.f32 0.5, %v1113
        %v1115 = vsub.f32 1.5, %v1114
        %v1116 = vmul.f32 %v1111, %v1115
        %vm1117 = vweird.f32 %v1005
        %vm1118 = vweird.f32 %v1111
        %vm1119 = vmor %vm1117, %vm1118
        %v1120 = vsel %vm1119, %v1111, %v1116
        %v1121 = vrsqrt.pop %v1006
        %v1122 = vmul.f32 %v1121, %v1006
        %v1123 = vmul.f32 %v1122, %v1121
        %v1124 = vmul.f32 0.5, %v1123
        %v1125 = vsub.f32 1.5, %v1124
        %v1126 = vmul.f32 %v1121, %v1125
        %vm1127 = vweird.f32 %v1006
        %vm1128 = vweird.f32 %v1121
        %vm1129 = vmor %vm1127, %vm1128
        %v1130 = vsel %vm1129, %v1121, %v1126
        %v1131 = vrsqrt.pop %v1007
        %v1132 = vmul.f32 %v1131, %v1007
        %v1133 = vmul.f32 %v1132, %v1131
        %v1134 = vmul.f32 0.5, %v1133
        %v1135 = vsub.f32 1.5, %v1134
        %v1136 = vmul.f32 %v1131, %v1135
        %vm1137 = vweird.f32 %v1007
        %vm1138 = vweird.f32 %v1131
        %vm1139 = vmor %vm1137, %vm1138
        %v1140 = vsel %vm1139, %v1131, %v1136
        %v1141 = vrsqrt.pop %v1008
        %v1142 = vmul.f32 %v1141, %v1008
        %v1143 = vmul.f32 %v1142, %v1141
        %v1144 = vmul.f32 0.5, %v1143
        %v1145 = vsub.f32 1.5, %v1144
        %v1146 = vmul.f32 %v1141, %v1145
        %vm1147 = vweird.f32 %v1008
        %vm1148 = vweird.f32 %v1141
        %vm1149 = vmor %vm1147, %vm1148
        %v1150 = vsel %vm1149, %v1141, %v1146
        %v1151 = vrsqrt.pop %v1009
        %v1152 = vmul.f32 %v1151, %v1009
        %v1153 = vmul.f32 %v1152, %v1151
        %v1154 = vmul.f32 0.5, %v1153
        %v1155 = vsub.f32 1.5, %v1154
        %v1156 = vmul.f32 %v1151, %v1155
        %vm1157 = vweird.f32 %v1009
        %vm1158 = vweird.f32 %v1151
        %vm1159 = vmor %vm1157, %vm1158
        %v1160 = vsel %vm1159, %v1151, %v1156
        %v1161 = vrsqrt.pop %v1010
        %v1162 = vmul.f32 %v1161, %v1010
        %v1163 = vmul.f32 %v1162, %v1161
        %v1164 = vmul.f32 0.5, %v1163
        %v1165 = vsub.f32 1.5, %v1164
        %v1166 = vmul.f32 %v1161, %v1165
        %vm1167 = vweird.f32 %v1010
        %vm1168 = vweird.f32 %v1161
        %vm1169 = vmor %vm1167, %vm1168
        %v1170 = vsel %vm1169, %v1161, %v1166
        %v1171 = vmul.f32 %v915, %v1020
        %v1172 = vmul.f32 %v916, %v1030
        %v1173 = vmul.f32 %v917, %v1040
        %v1174 = vmul.f32 %v918, %v1050
        %v1175 = vmul.f32 %v919, %v1060
        %v1176 = vmul.f32 %v920, %v1070
        %v1177 = vmul.f32 %v921, %v1080
        %v1178 = vmul.f32 %v922, %v1090
        %v1179 = vmul.f32 %v923, %v1100
        %v1180 = vmul.f32 %v924, %v1110
        %v1181 = vmul.f32 %v925, %v1120
        %v1182 = vmul.f32 %v926, %v1130
        %v1183 = vmul.f32 %v927, %v1140
        %v1184 = vmul.f32 %v928, %v1150
        %v1185 = vmul.f32 %v929, %v1160
        %v1186 = vmul.f32 %v930, %v1170
        %v1187 = vld [vmem:[#allocation10] ss:$0 sm:$0xff]
        %v1188 = vld [vmem:[#allocation10 + $0x1] ss:$0 sm:$0xff]
        %s1189 = scalar_lea.vmem [#allocation10], 2
        %v1190 = vld [vmem:[%s1189] ss:$8 sm:$0x3]
        %v1191 = vpack.c.bf16 %v786, %v784
        %v1192 = vpack.c.bf16 %v787, %v785
        %v1193 = vpack.c.bf16 %v790, %v788
        %v1194 = vpack.c.bf16 %v791, %v789
        %v1195 = vpack.c.bf16 %v794, %v792
        %v1196 = vpack.c.bf16 %v795, %v793
        %v1197 = vpack.c.bf16 %v798, %v796
        %v1198 = vpack.c.bf16 %v799, %v797
        %v1199 = vpack.c.bf16 %v802, %v800
        %v1200 = vpack.c.bf16 %v803, %v801
        %v1201 = vpack.c.bf16 %v806, %v804
        %v1202 = vpack.c.bf16 %v807, %v805
        %v1203 = vpack.c.bf16 %v810, %v808
        %v1204 = vpack.c.bf16 %v811, %v809
        %v1205 = vpack.c.bf16 %v814, %v812
        %v1206 = vpack.c.bf16 %v815, %v813
        %v1207 = vld [vmem:[#allocation7] sm:$0xf]
        %v1208 = vld [vmem:[#allocation7 + $0x4] sm:$0xf]
        %v1209 = vld [vmem:[#allocation7 + $0x8] sm:$0xf]
        %v1210 = vld [vmem:[#allocation7 + $0xc] sm:$0xf]
        %v1211 = vld [vmem:[#allocation7 + $0x10] sm:$0xf]
        %v1212 = vld [vmem:[#allocation7 + $0x14] sm:$0xf]
        %v1213 = vld [vmem:[#allocation7 + $0x18] sm:$0xf]
        %v1214 = vld [vmem:[#allocation7 + $0x1c] sm:$0xf]
        %v1215 = vld [vmem:[#allocation7 + $0x20] sm:$0xf]
        %v1216 = vld [vmem:[#allocation7 + $0x24] sm:$0xf]
        %v1217 = vld [vmem:[#allocation7 + $0x28] sm:$0xf]
        %v1218 = vld [vmem:[#allocation7 + $0x2c] sm:$0xf]
        %v1219 = vld [vmem:[#allocation7 + $0x30] sm:$0xf]
        %v1220 = vld [vmem:[#allocation7 + $0x34] sm:$0xf]
        %v1221 = vld [vmem:[#allocation7 + $0x38] sm:$0xf]
        %v1222 = vld [vmem:[#allocation7 + $0x3c] sm:$0xf]
        %v1223 = vld [vmem:[#allocation7 + $0x40] sm:$0xf]
        %v1224 = vld [vmem:[#allocation7 + $0x44] sm:$0xf]
        %v1225 = vld [vmem:[#allocation7 + $0x48] sm:$0xf]
        %v1226 = vld [vmem:[#allocation7 + $0x4c] sm:$0xf]
        %v1227 = vld [vmem:[#allocation7 + $0x50] sm:$0xf]
        %v1228 = vld [vmem:[#allocation7 + $0x54] sm:$0xf]
        %v1229 = vld [vmem:[#allocation7 + $0x58] sm:$0xf]
        %v1230 = vld [vmem:[#allocation7 + $0x5c] sm:$0xf]
        %v1231 = vld [vmem:[#allocation7 + $0x60] sm:$0xf]
        %v1232 = vld [vmem:[#allocation7 + $0x64] sm:$0xf]
        %v1233 = vld [vmem:[#allocation7 + $0x68] sm:$0xf]
        %v1234 = vld [vmem:[#allocation7 + $0x6c] sm:$0xf]
        %v1235 = vld [vmem:[#allocation7 + $0x70] sm:$0xf]
        %v1236 = vld [vmem:[#allocation7 + $0x74] sm:$0xf]
        %v1237 = vld [vmem:[#allocation7 + $0x78] sm:$0xf]
        %v1238 = vld [vmem:[#allocation7 + $0x7c] sm:$0xf]
        %v1239 = vpack.c.bf16 %v1172, %v1171
        %v1240 = vpack.c.bf16 %v1174, %v1173
        %v1241 = vpack.c.bf16 %v1176, %v1175
        %v1242 = vpack.c.bf16 %v1178, %v1177
        %v1243 = vpack.c.bf16 %v1180, %v1179
        %v1244 = vpack.c.bf16 %v1182, %v1181
        %v1245 = vpack.c.bf16 %v1184, %v1183
        %v1246 = vpack.c.bf16 %v1186, %v1185
        %v1247 = vld [vmem:[#allocation7 + $0x80] sm:$0xf]
        %v1248 = vld [vmem:[#allocation7 + $0x84] sm:$0xf]
        %v1249 = vld [vmem:[#allocation7 + $0x88] sm:$0xf]
        %v1250 = vld [vmem:[#allocation7 + $0x8c] sm:$0xf]
        %v1251 = vld [vmem:[#allocation7 + $0x90] sm:$0xf]
        %v1252 = vld [vmem:[#allocation7 + $0x94] sm:$0xf]
        %v1253 = vld [vmem:[#allocation7 + $0x98] sm:$0xf]
        %v1254 = vld [vmem:[#allocation7 + $0x9c] sm:$0xf]
        %v1255 = vld [vmem:[#allocation7 + $0xa0] sm:$0xf]
        %v1256 = vld [vmem:[#allocation7 + $0xa4] sm:$0xf]
        %v1257 = vld [vmem:[#allocation7 + $0xa8] sm:$0xf]
        %v1258 = vld [vmem:[#allocation7 + $0xac] sm:$0xf]
        %v1259 = vld [vmem:[#allocation7 + $0xb0] sm:$0xf]
        %v1260 = vld [vmem:[#allocation7 + $0xb4] sm:$0xf]
        %v1261 = vld [vmem:[#allocation7 + $0xb8] sm:$0xf]
        %v1262 = vld [vmem:[#allocation7 + $0xbc] sm:$0xf]
        %v1279 = vunpack.c.l.b16 %v1247
        %v1280 = vunpack.c.l.b16 %v1248
        %v1281 = vunpack.c.l.b16 %v1249
        %v1282 = vunpack.c.l.b16 %v1250
        %v1283 = vunpack.c.l.b16 %v1251
        %v1284 = vunpack.c.l.b16 %v1252
        %v1285 = vunpack.c.l.b16 %v1253
        %v1286 = vunpack.c.l.b16 %v1254
        %v1287 = vunpack.c.l.b16 %v1255
        %v1288 = vunpack.c.l.b16 %v1256
        %v1289 = vunpack.c.l.b16 %v1257
        %v1290 = vunpack.c.l.b16 %v1258
        %v1291 = vunpack.c.l.b16 %v1259
        %v1292 = vunpack.c.l.b16 %v1260
        %v1293 = vunpack.c.l.b16 %v1261
        %v1294 = vunpack.c.l.b16 %v1262
        %v1295 = vpack.c.b16 %v1280, %v1279
        %v1296 = vpack.c.b16 %v1282, %v1281
        %v1297 = vpack.c.b16 %v1284, %v1283
        %v1298 = vpack.c.b16 %v1286, %v1285
        %v1299 = vpack.c.b16 %v1288, %v1287
        %v1300 = vpack.c.b16 %v1290, %v1289
        %v1301 = vpack.c.b16 %v1292, %v1291
        %v1302 = vpack.c.b16 %v1294, %v1293
        %1311 = vmatpush.bf16.msra.mxu0 %v1302
        %1312 = vmatpush.bf16.msra.mxu0 %v1301
        %1313 = vmatpush.bf16.msra.mxu0 %v1300
        %1314 = vmatpush.bf16.msra.mxu0 %v1299
        %1315 = vmatpush.bf16.msra.mxu0 %v1298
        %1316 = vmatpush.bf16.msra.mxu0 %v1297
        %1317 = vmatpush.bf16.msra.mxu0 %v1296
        %1318 = vmatpush.bf16.msra.mxu0 %v1295
        %1319 = vmatmul.bf16.gmra.mxu0 %v1239
        %v1320 = vpop.f32.mrf.mxu0
        %v1321 = vadd.f32 0.0, %v1320
        %v1322 = vpop.f32.mrf.mxu0
        %v1323 = vadd.f32 0.0, %v1322
        %1324 = vmatmul.bf16.gmra.mxu0 %v1240
        %v1325 = vpop.f32.mrf.mxu0
        %v1326 = vadd.f32 0.0, %v1325
        %v1327 = vpop.f32.mrf.mxu0
        %v1328 = vadd.f32 0.0, %v1327
        %1329 = vmatmul.bf16.gmra.mxu0 %v1241
        %v1330 = vpop.f32.mrf.mxu0
        %v1331 = vadd.f32 0.0, %v1330
        %v1332 = vpop.f32.mrf.mxu0
        %v1333 = vadd.f32 0.0, %v1332
        %1334 = vmatmul.bf16.gmra.mxu0 %v1242
        %v1335 = vpop.f32.mrf.mxu0
        %v1336 = vadd.f32 0.0, %v1335
        %v1337 = vpop.f32.mrf.mxu0
        %v1338 = vadd.f32 0.0, %v1337
        %1339 = vmatmul.bf16.gmra.mxu0 %v1243
        %v1340 = vpop.f32.mrf.mxu0
        %v1341 = vadd.f32 0.0, %v1340
        %v1342 = vpop.f32.mrf.mxu0
        %v1343 = vadd.f32 0.0, %v1342
        %1344 = vmatmul.bf16.gmra.mxu0 %v1244
        %v1345 = vpop.f32.mrf.mxu0
        %v1346 = vadd.f32 0.0, %v1345
        %v1347 = vpop.f32.mrf.mxu0
        %v1348 = vadd.f32 0.0, %v1347
        %1349 = vmatmul.bf16.gmra.mxu0 %v1245
        %v1350 = vpop.f32.mrf.mxu0
        %v1351 = vadd.f32 0.0, %v1350
        %v1352 = vpop.f32.mrf.mxu0
        %v1353 = vadd.f32 0.0, %v1352
        %1354 = vmatmul.bf16.gmra.mxu0 %v1246
        %v1355 = vpop.f32.mrf.mxu0
        %v1356 = vadd.f32 0.0, %v1355
        %v1357 = vpop.f32.mrf.mxu0
        %v1358 = vadd.f32 0.0, %v1357
        %1359 = vdwg.mxu0
        %v1392 = vunpack.c.l.b16 %v1207
        %v1393 = vunpack.c.l.b16 %v1208
        %v1394 = vunpack.c.l.b16 %v1209
        %v1395 = vunpack.c.l.b16 %v1210
        %v1396 = vunpack.c.l.b16 %v1211
        %v1397 = vunpack.c.l.b16 %v1212
        %v1398 = vunpack.c.l.b16 %v1213
        %v1399 = vunpack.c.l.b16 %v1214
        %v1400 = vunpack.c.l.b16 %v1215
        %v1401 = vunpack.c.l.b16 %v1216
        %v1402 = vunpack.c.l.b16 %v1217
        %v1403 = vunpack.c.l.b16 %v1218
        %v1404 = vunpack.c.l.b16 %v1219
        %v1405 = vunpack.c.l.b16 %v1220
        %v1406 = vunpack.c.l.b16 %v1221
        %v1407 = vunpack.c.l.b16 %v1222
        %v1408 = vunpack.c.l.b16 %v1223
        %v1409 = vunpack.c.l.b16 %v1224
        %v1410 = vunpack.c.l.b16 %v1225
        %v1411 = vunpack.c.l.b16 %v1226
        %v1412 = vunpack.c.l.b16 %v1227
        %v1413 = vunpack.c.l.b16 %v1228
        %v1414 = vunpack.c.l.b16 %v1229
        %v1415 = vunpack.c.l.b16 %v1230
        %v1416 = vunpack.c.l.b16 %v1231
        %v1417 = vunpack.c.l.b16 %v1232
        %v1418 = vunpack.c.l.b16 %v1233
        %v1419 = vunpack.c.l.b16 %v1234
        %v1420 = vunpack.c.l.b16 %v1235
        %v1421 = vunpack.c.l.b16 %v1236
        %v1422 = vunpack.c.l.b16 %v1237
        %v1423 = vunpack.c.l.b16 %v1238
        %v1424 = vpack.c.b16 %v1393, %v1392
        %v1425 = vpack.c.b16 %v1395, %v1394
        %v1426 = vpack.c.b16 %v1397, %v1396
        %v1427 = vpack.c.b16 %v1399, %v1398
        %v1428 = vpack.c.b16 %v1401, %v1400
        %v1429 = vpack.c.b16 %v1403, %v1402
        %v1430 = vpack.c.b16 %v1405, %v1404
        %v1431 = vpack.c.b16 %v1407, %v1406
        %v1432 = vpack.c.b16 %v1409, %v1408
        %v1433 = vpack.c.b16 %v1411, %v1410
        %v1434 = vpack.c.b16 %v1413, %v1412
        %v1435 = vpack.c.b16 %v1415, %v1414
        %v1436 = vpack.c.b16 %v1417, %v1416
        %v1437 = vpack.c.b16 %v1419, %v1418
        %v1438 = vpack.c.b16 %v1421, %v1420
        %v1439 = vpack.c.b16 %v1423, %v1422
        %1456 = vmatpush.bf16.msra.mxu0 %v1431
        %1457 = vmatpush.bf16.msra.mxu0 %v1430
        %1458 = vmatpush.bf16.msra.mxu0 %v1429
        %1459 = vmatpush.bf16.msra.mxu0 %v1428
        %1460 = vmatpush.bf16.msra.mxu0 %v1427
        %1461 = vmatpush.bf16.msra.mxu0 %v1426
        %1462 = vmatpush.bf16.msra.mxu0 %v1425
        %1463 = vmatpush.bf16.msra.mxu0 %v1424
        %1464 = vmatmul.bf16.gmra.mxu0 %v1191
        %v1465 = vpop.f32.mrf.mxu0
        %v1466 = vadd.f32 %v1321, %v1465
        %v1467 = vpop.f32.mrf.mxu0
        %v1468 = vadd.f32 %v1323, %v1467
        %1469 = vmatmul.bf16.gmra.mxu0 %v1193
        %v1470 = vpop.f32.mrf.mxu0
        %v1471 = vadd.f32 %v1326, %v1470
        %v1472 = vpop.f32.mrf.mxu0
        %v1473 = vadd.f32 %v1328, %v1472
        %1474 = vmatmul.bf16.gmra.mxu0 %v1195
        %v1475 = vpop.f32.mrf.mxu0
        %v1476 = vadd.f32 %v1331, %v1475
        %v1477 = vpop.f32.mrf.mxu0
        %v1478 = vadd.f32 %v1333, %v1477
        %1479 = vmatmul.bf16.gmra.mxu0 %v1197
        %v1480 = vpop.f32.mrf.mxu0
        %v1481 = vadd.f32 %v1336, %v1480
        %v1482 = vpop.f32.mrf.mxu0
        %v1483 = vadd.f32 %v1338, %v1482
        %1484 = vmatmul.bf16.gmra.mxu0 %v1199
        %v1485 = vpop.f32.mrf.mxu0
        %v1486 = vadd.f32 %v1341, %v1485
        %v1487 = vpop.f32.mrf.mxu0
        %v1488 = vadd.f32 %v1343, %v1487
        %1489 = vmatmul.bf16.gmra.mxu0 %v1201
        %v1490 = vpop.f32.mrf.mxu0
        %v1491 = vadd.f32 %v1346, %v1490
        %v1492 = vpop.f32.mrf.mxu0
        %v1493 = vadd.f32 %v1348, %v1492
        %1494 = vmatmul.bf16.gmra.mxu0 %v1203
        %v1495 = vpop.f32.mrf.mxu0
        %v1496 = vadd.f32 %v1351, %v1495
        %v1497 = vpop.f32.mrf.mxu0
        %v1498 = vadd.f32 %v1353, %v1497
        %1499 = vmatmul.bf16.gmra.mxu0 %v1205
        %v1500 = vpop.f32.mrf.mxu0
        %v1501 = vadd.f32 %v1356, %v1500
        %v1502 = vpop.f32.mrf.mxu0
        %v1503 = vadd.f32 %v1358, %v1502
        %1504 = vdwg.mxu0
        %1505 = vmatpush.bf16.msra.mxu0 %v1439
        %1506 = vmatpush.bf16.msra.mxu0 %v1438
        %1507 = vmatpush.bf16.msra.mxu0 %v1437
        %1508 = vmatpush.bf16.msra.mxu0 %v1436
        %1509 = vmatpush.bf16.msra.mxu0 %v1435
        %1510 = vmatpush.bf16.msra.mxu0 %v1434
        %1511 = vmatpush.bf16.msra.mxu0 %v1433
        %1512 = vmatpush.bf16.msra.mxu0 %v1432
        %1513 = vmatmul.bf16.gmra.mxu0 %v1192
        %v1514 = vpop.f32.mrf.mxu0
        %v1515 = vadd.f32 %v1466, %v1514
        %v1516 = vpop.f32.mrf.mxu0
        %v1517 = vadd.f32 %v1468, %v1516
        %1518 = vmatmul.bf16.gmra.mxu0 %v1194
        %v1519 = vpop.f32.mrf.mxu0
        %v1520 = vadd.f32 %v1471, %v1519
        %v1521 = vpop.f32.mrf.mxu0
        %v1522 = vadd.f32 %v1473, %v1521
        %1523 = vmatmul.bf16.gmra.mxu0 %v1196
        %v1524 = vpop.f32.mrf.mxu0
        %v1525 = vadd.f32 %v1476, %v1524
        %v1526 = vpop.f32.mrf.mxu0
        %v1527 = vadd.f32 %v1478, %v1526
        %1528 = vmatmul.bf16.gmra.mxu0 %v1198
        %v1529 = vpop.f32.mrf.mxu0
        %v1530 = vadd.f32 %v1481, %v1529
        %v1531 = vpop.f32.mrf.mxu0
        %v1532 = vadd.f32 %v1483, %v1531
        %1533 = vmatmul.bf16.gmra.mxu0 %v1200
        %v1534 = vpop.f32.mrf.mxu0
        %v1535 = vadd.f32 %v1486, %v1534
        %v1536 = vpop.f32.mrf.mxu0
        %v1537 = vadd.f32 %v1488, %v1536
        %1538 = vmatmul.bf16.gmra.mxu0 %v1202
        %v1539 = vpop.f32.mrf.mxu0
        %v1540 = vadd.f32 %v1491, %v1539
        %v1541 = vpop.f32.mrf.mxu0
        %v1542 = vadd.f32 %v1493, %v1541
        %1543 = vmatmul.bf16.gmra.mxu0 %v1204
        %v1544 = vpop.f32.mrf.mxu0
        %v1545 = vadd.f32 %v1496, %v1544
        %v1546 = vpop.f32.mrf.mxu0
        %v1547 = vadd.f32 %v1498, %v1546
        %1548 = vmatmul.bf16.gmra.mxu0 %v1206
        %v1549 = vpop.f32.mrf.mxu0
        %v1550 = vadd.f32 %v1501, %v1549
        %v1551 = vpop.f32.mrf.mxu0
        %v1552 = vadd.f32 %v1503, %v1551
        %1553 = vdwg.mxu0
        %v1554 = vadd.f32 %v1515, %v1187
        %v1555 = vadd.f32 %v1517, %v1187
        %v1556 = vadd.f32 %v1520, %v1187
        %v1557 = vadd.f32 %v1522, %v1187
        %v1558 = vadd.f32 %v1525, %v1187
        %v1559 = vadd.f32 %v1527, %v1187
        %v1560 = vadd.f32 %v1530, %v1187
        %v1561 = vadd.f32 %v1532, %v1187
        %v1562 = vadd.f32 %v1535, %v1187
        %v1563 = vadd.f32 %v1537, %v1187
        %v1564 = vadd.f32 %v1540, %v1187
        %v1565 = vadd.f32 %v1542, %v1187
        %v1566 = vadd.f32 %v1545, %v1187
        %v1567 = vadd.f32 %v1547, %v1187
        %v1568 = vadd.f32 %v1550, %v1187
        %v1569 = vadd.f32 %v1552, %v1187
        %v1570 = vmax.f32 %v1554, 0.0
        %v1571 = vmax.f32 %v1555, 0.0
        %v1572 = vmax.f32 %v1556, 0.0
        %v1573 = vmax.f32 %v1557, 0.0
        %v1574 = vmax.f32 %v1558, 0.0
        %v1575 = vmax.f32 %v1559, 0.0
        %v1576 = vmax.f32 %v1560, 0.0
        %v1577 = vmax.f32 %v1561, 0.0
        %v1578 = vmax.f32 %v1562, 0.0
        %v1579 = vmax.f32 %v1563, 0.0
        %v1580 = vmax.f32 %v1564, 0.0
        %v1581 = vmax.f32 %v1565, 0.0
        %v1582 = vmax.f32 %v1566, 0.0
        %v1583 = vmax.f32 %v1567, 0.0
        %v1584 = vmax.f32 %v1568, 0.0
        %v1585 = vmax.f32 %v1569, 0.0
        %v1586 = vpack.c.bf16 %v1571, %v1570
        %v1587 = vpack.c.bf16 %v1573, %v1572
        %v1588 = vpack.c.bf16 %v1575, %v1574
        %v1589 = vpack.c.bf16 %v1577, %v1576
        %v1590 = vpack.c.bf16 %v1579, %v1578
        %v1591 = vpack.c.bf16 %v1581, %v1580
        %v1592 = vpack.c.bf16 %v1583, %v1582
        %v1593 = vpack.c.bf16 %v1585, %v1584
        %v1594 = vld [vmem:[#allocation8] sm:$0xf]
        %v1595 = vld [vmem:[#allocation8 + $0xc] sm:$0xf]
        %v1596 = vld [vmem:[#allocation8 + $0x18] sm:$0xf]
        %v1597 = vld [vmem:[#allocation8 + $0x24] sm:$0xf]
        %v1598 = vld [vmem:[#allocation8 + $0x30] sm:$0xf]
        %v1599 = vld [vmem:[#allocation8 + $0x3c] sm:$0xf]
        %v1600 = vld [vmem:[#allocation8 + $0x48] sm:$0xf]
        %v1601 = vld [vmem:[#allocation8 + $0x54] sm:$0xf]
        %v1602 = vld [vmem:[#allocation8 + $0x60] sm:$0xf]
        %v1603 = vld [vmem:[#allocation8 + $0x6c] sm:$0xf]
        %v1604 = vld [vmem:[#allocation8 + $0x78] sm:$0xf]
        %v1605 = vld [vmem:[#allocation8 + $0x84] sm:$0xf]
        %v1606 = vld [vmem:[#allocation8 + $0x90] sm:$0xf]
        %v1607 = vld [vmem:[#allocation8 + $0x9c] sm:$0xf]
        %v1608 = vld [vmem:[#allocation8 + $0xa8] sm:$0xf]
        %v1609 = vld [vmem:[#allocation8 + $0xb4] sm:$0xf]
        %v1626 = vunpack.c.l.b16 %v1594
        %v1627 = vunpack.c.l.b16 %v1595
        %v1628 = vunpack.c.l.b16 %v1596
        %v1629 = vunpack.c.l.b16 %v1597
        %v1630 = vunpack.c.l.b16 %v1598
        %v1631 = vunpack.c.l.b16 %v1599
        %v1632 = vunpack.c.l.b16 %v1600
        %v1633 = vunpack.c.l.b16 %v1601
        %v1634 = vunpack.c.l.b16 %v1602
        %v1635 = vunpack.c.l.b16 %v1603
        %v1636 = vunpack.c.l.b16 %v1604
        %v1637 = vunpack.c.l.b16 %v1605
        %v1638 = vunpack.c.l.b16 %v1606
        %v1639 = vunpack.c.l.b16 %v1607
        %v1640 = vunpack.c.l.b16 %v1608
        %v1641 = vunpack.c.l.b16 %v1609
        %v1642 = vpack.c.b16 %v1627, %v1626
        %v1643 = vpack.c.b16 %v1629, %v1628
        %v1644 = vpack.c.b16 %v1631, %v1630
        %v1645 = vpack.c.b16 %v1633, %v1632
        %v1646 = vpack.c.b16 %v1635, %v1634
        %v1647 = vpack.c.b16 %v1637, %v1636
        %v1648 = vpack.c.b16 %v1639, %v1638
        %v1649 = vpack.c.b16 %v1641, %v1640
        %1658 = vmatpush.bf16.msra.mxu0 %v1649
        %1659 = vmatpush.bf16.msra.mxu0 %v1648
        %1660 = vmatpush.bf16.msra.mxu0 %v1647
        %1661 = vmatpush.bf16.msra.mxu0 %v1646
        %1662 = vmatpush.bf16.msra.mxu0 %v1645
        %1663 = vmatpush.bf16.msra.mxu0 %v1644
        %1664 = vmatpush.bf16.msra.mxu0 %v1643
        %1665 = vmatpush.bf16.msra.mxu0 %v1642
        %1666 = vmatmul.bf16.gmra.mxu0 %v1586
        %v1667 = vpop.f32.mrf.mxu0
        %v1668 = vadd.f32 %v1188, %v1667
        %v1669 = vpop.f32.mrf.mxu0
        %v1670 = vadd.f32 %v1188, %v1669
        %1671 = vmatmul.bf16.gmra.mxu0 %v1587
        %v1672 = vpop.f32.mrf.mxu0
        %v1673 = vadd.f32 %v1188, %v1672
        %v1674 = vpop.f32.mrf.mxu0
        %v1675 = vadd.f32 %v1188, %v1674
        %1676 = vmatmul.bf16.gmra.mxu0 %v1588
        %v1677 = vpop.f32.mrf.mxu0
        %v1678 = vadd.f32 %v1188, %v1677
        %v1679 = vpop.f32.mrf.mxu0
        %v1680 = vadd.f32 %v1188, %v1679
        %1681 = vmatmul.bf16.gmra.mxu0 %v1589
        %v1682 = vpop.f32.mrf.mxu0
        %v1683 = vadd.f32 %v1188, %v1682
        %v1684 = vpop.f32.mrf.mxu0
        %v1685 = vadd.f32 %v1188, %v1684
        %1686 = vmatmul.bf16.gmra.mxu0 %v1590
        %v1687 = vpop.f32.mrf.mxu0
        %v1688 = vadd.f32 %v1188, %v1687
        %v1689 = vpop.f32.mrf.mxu0
        %v1690 = vadd.f32 %v1188, %v1689
        %1691 = vmatmul.bf16.gmra.mxu0 %v1591
        %v1692 = vpop.f32.mrf.mxu0
        %v1693 = vadd.f32 %v1188, %v1692
        %v1694 = vpop.f32.mrf.mxu0
        %v1695 = vadd.f32 %v1188, %v1694
        %1696 = vmatmul.bf16.gmra.mxu0 %v1592
        %v1697 = vpop.f32.mrf.mxu0
        %v1698 = vadd.f32 %v1188, %v1697
        %v1699 = vpop.f32.mrf.mxu0
        %v1700 = vadd.f32 %v1188, %v1699
        %1701 = vmatmul.bf16.gmra.mxu0 %v1593
        %v1702 = vpop.f32.mrf.mxu0
        %v1703 = vadd.f32 %v1188, %v1702
        %v1704 = vpop.f32.mrf.mxu0
        %v1705 = vadd.f32 %v1188, %v1704
        %1706 = vdwg.mxu0
        %v1707 = vmax.f32 %v1668, 0.0
        %v1708 = vmax.f32 %v1670, 0.0
        %v1709 = vmax.f32 %v1673, 0.0
        %v1710 = vmax.f32 %v1675, 0.0
        %v1711 = vmax.f32 %v1678, 0.0
        %v1712 = vmax.f32 %v1680, 0.0
        %v1713 = vmax.f32 %v1683, 0.0
        %v1714 = vmax.f32 %v1685, 0.0
        %v1715 = vmax.f32 %v1688, 0.0
        %v1716 = vmax.f32 %v1690, 0.0
        %v1717 = vmax.f32 %v1693, 0.0
        %v1718 = vmax.f32 %v1695, 0.0
        %v1719 = vmax.f32 %v1698, 0.0
        %v1720 = vmax.f32 %v1700, 0.0
        %v1721 = vmax.f32 %v1703, 0.0
        %v1722 = vmax.f32 %v1705, 0.0
        %v1723 = vpack.c.bf16 %v1708, %v1707
        %v1724 = vpack.c.bf16 %v1710, %v1709
        %v1725 = vpack.c.bf16 %v1712, %v1711
        %v1726 = vpack.c.bf16 %v1714, %v1713
        %v1727 = vpack.c.bf16 %v1716, %v1715
        %v1728 = vpack.c.bf16 %v1718, %v1717
        %v1729 = vpack.c.bf16 %v1720, %v1719
        %v1730 = vpack.c.bf16 %v1722, %v1721
        %v1731 = vld [vmem:[#allocation8 + $0x4] sm:$0xff]
        %v1732 = vld [vmem:[#allocation8 + $0x10] sm:$0xff]
        %v1733 = vld [vmem:[#allocation8 + $0x1c] sm:$0xff]
        %v1734 = vld [vmem:[#allocation8 + $0x28] sm:$0xff]
        %v1735 = vld [vmem:[#allocation8 + $0x34] sm:$0xff]
        %v1736 = vld [vmem:[#allocation8 + $0x40] sm:$0xff]
        %v1737 = vld [vmem:[#allocation8 + $0x4c] sm:$0xff]
        %v1738 = vld [vmem:[#allocation8 + $0x58] sm:$0xff]
        %v1739 = vld [vmem:[#allocation8 + $0x64] sm:$0xff]
        %v1740 = vld [vmem:[#allocation8 + $0x70] sm:$0xff]
        %v1741 = vld [vmem:[#allocation8 + $0x7c] sm:$0xff]
        %v1742 = vld [vmem:[#allocation8 + $0x88] sm:$0xff]
        %v1743 = vld [vmem:[#allocation8 + $0x94] sm:$0xff]
        %v1744 = vld [vmem:[#allocation8 + $0xa0] sm:$0xff]
        %v1745 = vld [vmem:[#allocation8 + $0xac] sm:$0xff]
        %v1746 = vld [vmem:[#allocation8 + $0xb8] sm:$0xff]
        %v1748 = vperm.slane %v1190, 0
        %v1749 = vperm.slane %v1190, 1
        %v1768 = vunpack.c.l.b16 %v1731
        %v1769 = vunpack.c.h.b16 %v1731
        %v1770 = vunpack.c.l.b16 %v1732
        %v1771 = vunpack.c.h.b16 %v1732
        %v1772 = vunpack.c.l.b16 %v1733
        %v1773 = vunpack.c.h.b16 %v1733
        %v1774 = vunpack.c.l.b16 %v1734
        %v1775 = vunpack.c.h.b16 %v1734
        %v1776 = vunpack.c.l.b16 %v1735
        %v1777 = vunpack.c.h.b16 %v1735
        %v1778 = vunpack.c.l.b16 %v1736
        %v1779 = vunpack.c.h.b16 %v1736
        %v1780 = vunpack.c.l.b16 %v1737
        %v1781 = vunpack.c.h.b16 %v1737
        %v1782 = vunpack.c.l.b16 %v1738
        %v1783 = vunpack.c.h.b16 %v1738
        %v1784 = vunpack.c.l.b16 %v1739
        %v1785 = vunpack.c.h.b16 %v1739
        %v1786 = vunpack.c.l.b16 %v1740
        %v1787 = vunpack.c.h.b16 %v1740
        %v1788 = vunpack.c.l.b16 %v1741
        %v1789 = vunpack.c.h.b16 %v1741
        %v1790 = vunpack.c.l.b16 %v1742
        %v1791 = vunpack.c.h.b16 %v1742
        %v1792 = vunpack.c.l.b16 %v1743
        %v1793 = vunpack.c.h.b16 %v1743
        %v1794 = vunpack.c.l.b16 %v1744
        %v1795 = vunpack.c.h.b16 %v1744
        %v1796 = vunpack.c.l.b16 %v1745
        %v1797 = vunpack.c.h.b16 %v1745
        %v1798 = vunpack.c.l.b16 %v1746
        %v1799 = vunpack.c.h.b16 %v1746
        %v1800 = vpack.c.b16 %v1770, %v1768
        %v1801 = vpack.c.b16 %v1771, %v1769
        %v1802 = vpack.c.b16 %v1774, %v1772
        %v1803 = vpack.c.b16 %v1775, %v1773
        %v1804 = vpack.c.b16 %v1778, %v1776
        %v1805 = vpack.c.b16 %v1779, %v1777
        %v1806 = vpack.c.b16 %v1782, %v1780
        %v1807 = vpack.c.b16 %v1783, %v1781
        %v1808 = vpack.c.b16 %v1786, %v1784
        %v1809 = vpack.c.b16 %v1787, %v1785
        %v1810 = vpack.c.b16 %v1790, %v1788
        %v1811 = vpack.c.b16 %v1791, %v1789
        %v1812 = vpack.c.b16 %v1794, %v1792
        %v1813 = vpack.c.b16 %v1795, %v1793
        %v1814 = vpack.c.b16 %v1798, %v1796
        %v1815 = vpack.c.b16 %v1799, %v1797
        %1832 = vmatpush.bf16.msra.mxu0 %v1814
        %1833 = vmatpush.bf16.msra.mxu0 %v1812
        %1834 = vmatpush.bf16.msra.mxu0 %v1810
        %1835 = vmatpush.bf16.msra.mxu0 %v1808
        %1836 = vmatpush.bf16.msra.mxu0 %v1806
        %1837 = vmatpush.bf16.msra.mxu0 %v1804
        %1838 = vmatpush.bf16.msra.mxu0 %v1802
        %1839 = vmatpush.bf16.msra.mxu0 %v1800
        %1840 = vmatmul.bf16.gmra.mxu0 %v1723
        %v1841 = vpop.f32.mrf.mxu0
        %v1842 = vadd.f32 %v1748, %v1841
        %v1843 = vpop.f32.mrf.mxu0
        %v1844 = vadd.f32 %v1748, %v1843
        %1845 = vmatmul.bf16.gmra.mxu0 %v1724
        %v1846 = vpop.f32.mrf.mxu0
        %v1847 = vadd.f32 %v1748, %v1846
        %v1848 = vpop.f32.mrf.mxu0
        %v1849 = vadd.f32 %v1748, %v1848
        %1850 = vmatmul.bf16.gmra.mxu0 %v1725
        %v1851 = vpop.f32.mrf.mxu0
        %v1852 = vadd.f32 %v1748, %v1851
        %v1853 = vpop.f32.mrf.mxu0
        %v1854 = vadd.f32 %v1748, %v1853
        %1855 = vmatmul.bf16.gmra.mxu0 %v1726
        %v1856 = vpop.f32.mrf.mxu0
        %v1857 = vadd.f32 %v1748, %v1856
        %v1858 = vpop.f32.mrf.mxu0
        %v1859 = vadd.f32 %v1748, %v1858
        %1860 = vmatmul.bf16.gmra.mxu0 %v1727
        %v1861 = vpop.f32.mrf.mxu0
        %v1862 = vadd.f32 %v1748, %v1861
        %v1863 = vpop.f32.mrf.mxu0
        %v1864 = vadd.f32 %v1748, %v1863
        %1865 = vmatmul.bf16.gmra.mxu0 %v1728
        %v1866 = vpop.f32.mrf.mxu0
        %v1867 = vadd.f32 %v1748, %v1866
        %v1868 = vpop.f32.mrf.mxu0
        %v1869 = vadd.f32 %v1748, %v1868
        %1870 = vmatmul.bf16.gmra.mxu0 %v1729
        %v1871 = vpop.f32.mrf.mxu0
        %v1872 = vadd.f32 %v1748, %v1871
        %v1873 = vpop.f32.mrf.mxu0
        %v1874 = vadd.f32 %v1748, %v1873
        %1875 = vmatmul.bf16.gmra.mxu0 %v1730
        %v1876 = vpop.f32.mrf.mxu0
        %v1877 = vadd.f32 %v1748, %v1876
        %v1878 = vpop.f32.mrf.mxu0
        %v1879 = vadd.f32 %v1748, %v1878
        %1880 = vdwg.mxu0
        %1881 = vmatpush.bf16.msra.mxu0 %v1815
        %1882 = vmatpush.bf16.msra.mxu0 %v1813
        %1883 = vmatpush.bf16.msra.mxu0 %v1811
        %1884 = vmatpush.bf16.msra.mxu0 %v1809
        %1885 = vmatpush.bf16.msra.mxu0 %v1807
        %1886 = vmatpush.bf16.msra.mxu0 %v1805
        %1887 = vmatpush.bf16.msra.mxu0 %v1803
        %1888 = vmatpush.bf16.msra.mxu0 %v1801
        %1889 = vmatmul.bf16.gmra.mxu0 %v1723
        %v1890 = vpop.f32.mrf.mxu0
        %v1891 = vadd.f32 %v1749, %v1890
        %v1892 = vpop.f32.mrf.mxu0
        %v1893 = vadd.f32 %v1749, %v1892
        %1894 = vmatmul.bf16.gmra.mxu0 %v1724
        %v1895 = vpop.f32.mrf.mxu0
        %v1896 = vadd.f32 %v1749, %v1895
        %v1897 = vpop.f32.mrf.mxu0
        %v1898 = vadd.f32 %v1749, %v1897
        %1899 = vmatmul.bf16.gmra.mxu0 %v1725
        %v1900 = vpop.f32.mrf.mxu0
        %v1901 = vadd.f32 %v1749, %v1900
        %v1902 = vpop.f32.mrf.mxu0
        %v1903 = vadd.f32 %v1749, %v1902
        %1904 = vmatmul.bf16.gmra.mxu0 %v1726
        %v1905 = vpop.f32.mrf.mxu0
        %v1906 = vadd.f32 %v1749, %v1905
        %v1907 = vpop.f32.mrf.mxu0
        %v1908 = vadd.f32 %v1749, %v1907
        %1909 = vmatmul.bf16.gmra.mxu0 %v1727
        %v1910 = vpop.f32.mrf.mxu0
        %v1911 = vadd.f32 %v1749, %v1910
        %v1912 = vpop.f32.mrf.mxu0
        %v1913 = vadd.f32 %v1749, %v1912
        %1914 = vmatmul.bf16.gmra.mxu0 %v1728
        %v1915 = vpop.f32.mrf.mxu0
        %v1916 = vadd.f32 %v1749, %v1915
        %v1917 = vpop.f32.mrf.mxu0
        %v1918 = vadd.f32 %v1749, %v1917
        %1919 = vmatmul.bf16.gmra.mxu0 %v1729
        %v1920 = vpop.f32.mrf.mxu0
        %v1921 = vadd.f32 %v1749, %v1920
        %v1922 = vpop.f32.mrf.mxu0
        %v1923 = vadd.f32 %v1749, %v1922
        %1924 = vmatmul.bf16.gmra.mxu0 %v1730
        %v1925 = vpop.f32.mrf.mxu0
        %v1926 = vadd.f32 %v1749, %v1925
        %v1927 = vpop.f32.mrf.mxu0
        %v1928 = vadd.f32 %v1749, %v1927
        %1929 = vdwg.mxu0
        %1930 = vst [vmem:[%s365] sm:$0xff] %v1842
        %1931 = vst [vmem:[%s365 + $0x8] sm:$0xff] %v1844
        %1932 = vst [vmem:[%s365 + $0x10] sm:$0xff] %v1847
        %1933 = vst [vmem:[%s365 + $0x18] sm:$0xff] %v1849
        %1934 = vst [vmem:[%s365 + $0x20] sm:$0xff] %v1852
        %1935 = vst [vmem:[%s365 + $0x28] sm:$0xff] %v1854
        %1936 = vst [vmem:[%s365 + $0x30] sm:$0xff] %v1857
        %1937 = vst [vmem:[%s365 + $0x38] sm:$0xff] %v1859
        %1938 = vst [vmem:[%s365 + $0x40] sm:$0xff] %v1862
        %1939 = vst [vmem:[%s365 + $0x48] sm:$0xff] %v1864
        %1940 = vst [vmem:[%s365 + $0x50] sm:$0xff] %v1867
        %1941 = vst [vmem:[%s365 + $0x58] sm:$0xff] %v1869
        %1942 = vst [vmem:[%s365 + $0x60] sm:$0xff] %v1872
        %1943 = vst [vmem:[%s365 + $0x68] sm:$0xff] %v1874
        %1944 = vst [vmem:[%s365 + $0x70] sm:$0xff] %v1877
        %1945 = vst [vmem:[%s365 + $0x78] sm:$0xff] %v1879
        %1946 = vmax.xlane.f32.xlu0 %v1891
        %v1947 = vpop.xlane.xlu0 %1946
        %1948 = vmax.xlane.f32.xlu0 %v1893
        %v1949 = vpop.xlane.xlu0 %1948
        %1950 = vmax.xlane.f32.xlu0 %v1896
        %v1951 = vpop.xlane.xlu0 %1950
        %1952 = vmax.xlane.f32.xlu0 %v1898
        %v1953 = vpop.xlane.xlu0 %1952
        %1954 = vmax.xlane.f32.xlu0 %v1901
        %v1955 = vpop.xlane.xlu0 %1954
        %1956 = vmax.xlane.f32.xlu0 %v1903
        %v1957 = vpop.xlane.xlu0 %1956
        %1958 = vmax.xlane.f32.xlu0 %v1906
        %v1959 = vpop.xlane.xlu0 %1958
        %1960 = vmax.xlane.f32.xlu0 %v1908
        %v1961 = vpop.xlane.xlu0 %1960
        %1962 = vmax.xlane.f32.xlu0 %v1911
        %v1963 = vpop.xlane.xlu0 %1962
        %1964 = vmax.xlane.f32.xlu0 %v1913
        %v1965 = vpop.xlane.xlu0 %1964
        %1966 = vmax.xlane.f32.xlu0 %v1916
        %v1967 = vpop.xlane.xlu0 %1966
        %1968 = vmax.xlane.f32.xlu0 %v1918
        %v1969 = vpop.xlane.xlu0 %1968
        %1970 = vmax.xlane.f32.xlu0 %v1921
        %v1971 = vpop.xlane.xlu0 %1970
        %1972 = vmax.xlane.f32.xlu0 %v1923
        %v1973 = vpop.xlane.xlu0 %1972
        %1974 = vmax.xlane.f32.xlu0 %v1926
        %v1975 = vpop.xlane.xlu0 %1974
        %1976 = vmax.xlane.f32.xlu0 %v1928
        %v1977 = vpop.xlane.xlu0 %1976
        %vm1978 = vcmp.ge.f32.partialorder %v1891, %v1947
        %vm1979 = vcmp.ge.f32.partialorder %v1893, %v1949
        %vm1980 = vcmp.ge.f32.partialorder %v1896, %v1951
        %vm1981 = vcmp.ge.f32.partialorder %v1898, %v1953
        %vm1982 = vcmp.ge.f32.partialorder %v1901, %v1955
        %vm1983 = vcmp.ge.f32.partialorder %v1903, %v1957
        %vm1984 = vcmp.ge.f32.partialorder %v1906, %v1959
        %vm1985 = vcmp.ge.f32.partialorder %v1908, %v1961
        %vm1986 = vcmp.ge.f32.partialorder %v1911, %v1963
        %vm1987 = vcmp.ge.f32.partialorder %v1913, %v1965
        %vm1988 = vcmp.ge.f32.partialorder %v1916, %v1967
        %vm1989 = vcmp.ge.f32.partialorder %v1918, %v1969
        %vm1990 = vcmp.ge.f32.partialorder %v1921, %v1971
        %vm1991 = vcmp.ge.f32.partialorder %v1923, %v1973
        %vm1992 = vcmp.ge.f32.partialorder %v1926, %v1975
        %vm1993 = vcmp.ge.f32.partialorder %v1928, %v1977
        %v1994 = vsel %vm1978, %v833, 128
        %v1995 = vsel %vm1979, %v833, 128
        %v1996 = vsel %vm1980, %v833, 128
        %v1997 = vsel %vm1981, %v833, 128
        %v1998 = vsel %vm1982, %v833, 128
        %v1999 = vsel %vm1983, %v833, 128
        %v2000 = vsel %vm1984, %v833, 128
        %v2001 = vsel %vm1985, %v833, 128
        %v2002 = vsel %vm1986, %v833, 128
        %v2003 = vsel %vm1987, %v833, 128
        %v2004 = vsel %vm1988, %v833, 128
        %v2005 = vsel %vm1989, %v833, 128
        %v2006 = vsel %vm1990, %v833, 128
        %v2007 = vsel %vm1991, %v833, 128
        %v2008 = vsel %vm1992, %v833, 128
        %v2009 = vsel %vm1993, %v833, 128
        %v2010 = vand.u32 %v1994, 65535
        %v2011 = vshra.s32 %v1994, 16
        %v2012 = vcvt.s32.f32 %v2010
        %v2013 = vcvt.s32.f32 %v2011
        %2014 = vmin.xlane.f32.xlu0 %v2013
        %v2015 = vpop.xlane.xlu0 %2014
        %vm2016 = vcmp.eq.f32.partialorder %v2013, %v2015
        %v2017 = vsel %vm2016, %v2012, inf
        %2018 = vmin.xlane.f32.xlu0 %v2017
        %v2019 = vpop.xlane.xlu0 %2018
        %v2020 = vcvt.f32.s32 %v2019
        %v2021 = vcvt.f32.s32 %v2015
        %v2022 = vshll.u32 %v2021, 16
        %v2023 = vadd.s32 %v2022, %v2020
        %v2024 = vand.u32 %v1995, 65535
        %v2025 = vshra.s32 %v1995, 16
        %v2026 = vcvt.s32.f32 %v2024
        %v2027 = vcvt.s32.f32 %v2025
        %2028 = vmin.xlane.f32.xlu0 %v2027
        %v2029 = vpop.xlane.xlu0 %2028
        %vm2030 = vcmp.eq.f32.partialorder %v2027, %v2029
        %v2031 = vsel %vm2030, %v2026, inf
        %2032 = vmin.xlane.f32.xlu0 %v2031
        %v2033 = vpop.xlane.xlu0 %2032
        %v2034 = vcvt.f32.s32 %v2033
        %v2035 = vcvt.f32.s32 %v2029
        %v2036 = vshll.u32 %v2035, 16
        %v2037 = vadd.s32 %v2036, %v2034
        %v2038 = vand.u32 %v1996, 65535
        %v2039 = vshra.s32 %v1996, 16
        %v2040 = vcvt.s32.f32 %v2038
        %v2041 = vcvt.s32.f32 %v2039
        %2042 = vmin.xlane.f32.xlu0 %v2041
        %v2043 = vpop.xlane.xlu0 %2042
        %vm2044 = vcmp.eq.f32.partialorder %v2041, %v2043
        %v2045 = vsel %vm2044, %v2040, inf
        %2046 = vmin.xlane.f32.xlu0 %v2045
        %v2047 = vpop.xlane.xlu0 %2046
        %v2048 = vcvt.f32.s32 %v2047
        %v2049 = vcvt.f32.s32 %v2043
        %v2050 = vshll.u32 %v2049, 16
        %v2051 = vadd.s32 %v2050, %v2048
        %v2052 = vand.u32 %v1997, 65535
        %v2053 = vshra.s32 %v1997, 16
        %v2054 = vcvt.s32.f32 %v2052
        %v2055 = vcvt.s32.f32 %v2053
        %2056 = vmin.xlane.f32.xlu0 %v2055
        %v2057 = vpop.xlane.xlu0 %2056
        %vm2058 = vcmp.eq.f32.partialorder %v2055, %v2057
        %v2059 = vsel %vm2058, %v2054, inf
        %2060 = vmin.xlane.f32.xlu0 %v2059
        %v2061 = vpop.xlane.xlu0 %2060
        %v2062 = vcvt.f32.s32 %v2061
        %v2063 = vcvt.f32.s32 %v2057
        %v2064 = vshll.u32 %v2063, 16
        %v2065 = vadd.s32 %v2064, %v2062
        %v2066 = vand.u32 %v1998, 65535
        %v2067 = vshra.s32 %v1998, 16
        %v2068 = vcvt.s32.f32 %v2066
        %v2069 = vcvt.s32.f32 %v2067
        %2070 = vmin.xlane.f32.xlu0 %v2069
        %v2071 = vpop.xlane.xlu0 %2070
        %vm2072 = vcmp.eq.f32.partialorder %v2069, %v2071
        %v2073 = vsel %vm2072, %v2068, inf
        %2074 = vmin.xlane.f32.xlu0 %v2073
        %v2075 = vpop.xlane.xlu0 %2074
        %v2076 = vcvt.f32.s32 %v2075
        %v2077 = vcvt.f32.s32 %v2071
        %v2078 = vshll.u32 %v2077, 16
        %v2079 = vadd.s32 %v2078, %v2076
        %v2080 = vand.u32 %v1999, 65535
        %v2081 = vshra.s32 %v1999, 16
        %v2082 = vcvt.s32.f32 %v2080
        %v2083 = vcvt.s32.f32 %v2081
        %2084 = vmin.xlane.f32.xlu0 %v2083
        %v2085 = vpop.xlane.xlu0 %2084
        %vm2086 = vcmp.eq.f32.partialorder %v2083, %v2085
        %v2087 = vsel %vm2086, %v2082, inf
        %2088 = vmin.xlane.f32.xlu0 %v2087
        %v2089 = vpop.xlane.xlu0 %2088
        %v2090 = vcvt.f32.s32 %v2089
        %v2091 = vcvt.f32.s32 %v2085
        %v2092 = vshll.u32 %v2091, 16
        %v2093 = vadd.s32 %v2092, %v2090
        %v2094 = vand.u32 %v2000, 65535
        %v2095 = vshra.s32 %v2000, 16
        %v2096 = vcvt.s32.f32 %v2094
        %v2097 = vcvt.s32.f32 %v2095
        %2098 = vmin.xlane.f32.xlu0 %v2097
        %v2099 = vpop.xlane.xlu0 %2098
        %vm2100 = vcmp.eq.f32.partialorder %v2097, %v2099
        %v2101 = vsel %vm2100, %v2096, inf
        %2102 = vmin.xlane.f32.xlu0 %v2101
        %v2103 = vpop.xlane.xlu0 %2102
        %v2104 = vcvt.f32.s32 %v2103
        %v2105 = vcvt.f32.s32 %v2099
        %v2106 = vshll.u32 %v2105, 16
        %v2107 = vadd.s32 %v2106, %v2104
        %v2108 = vand.u32 %v2001, 65535
        %v2109 = vshra.s32 %v2001, 16
        %v2110 = vcvt.s32.f32 %v2108
        %v2111 = vcvt.s32.f32 %v2109
        %2112 = vmin.xlane.f32.xlu0 %v2111
        %v2113 = vpop.xlane.xlu0 %2112
        %vm2114 = vcmp.eq.f32.partialorder %v2111, %v2113
        %v2115 = vsel %vm2114, %v2110, inf
        %2116 = vmin.xlane.f32.xlu0 %v2115
        %v2117 = vpop.xlane.xlu0 %2116
        %v2118 = vcvt.f32.s32 %v2117
        %v2119 = vcvt.f32.s32 %v2113
        %v2120 = vshll.u32 %v2119, 16
        %v2121 = vadd.s32 %v2120, %v2118
        %v2122 = vand.u32 %v2002, 65535
        %v2123 = vshra.s32 %v2002, 16
        %v2124 = vcvt.s32.f32 %v2122
        %v2125 = vcvt.s32.f32 %v2123
        %2126 = vmin.xlane.f32.xlu0 %v2125
        %v2127 = vpop.xlane.xlu0 %2126
        %vm2128 = vcmp.eq.f32.partialorder %v2125, %v2127
        %v2129 = vsel %vm2128, %v2124, inf
        %2130 = vmin.xlane.f32.xlu0 %v2129
        %v2131 = vpop.xlane.xlu0 %2130
        %v2132 = vcvt.f32.s32 %v2131
        %v2133 = vcvt.f32.s32 %v2127
        %v2134 = vshll.u32 %v2133, 16
        %v2135 = vadd.s32 %v2134, %v2132
        %v2136 = vand.u32 %v2003, 65535
        %v2137 = vshra.s32 %v2003, 16
        %v2138 = vcvt.s32.f32 %v2136
        %v2139 = vcvt.s32.f32 %v2137
        %2140 = vmin.xlane.f32.xlu0 %v2139
        %v2141 = vpop.xlane.xlu0 %2140
        %vm2142 = vcmp.eq.f32.partialorder %v2139, %v2141
        %v2143 = vsel %vm2142, %v2138, inf
        %2144 = vmin.xlane.f32.xlu0 %v2143
        %v2145 = vpop.xlane.xlu0 %2144
        %v2146 = vcvt.f32.s32 %v2145
        %v2147 = vcvt.f32.s32 %v2141
        %v2148 = vshll.u32 %v2147, 16
        %v2149 = vadd.s32 %v2148, %v2146
        %v2150 = vand.u32 %v2004, 65535
        %v2151 = vshra.s32 %v2004, 16
        %v2152 = vcvt.s32.f32 %v2150
        %v2153 = vcvt.s32.f32 %v2151
        %2154 = vmin.xlane.f32.xlu0 %v2153
        %v2155 = vpop.xlane.xlu0 %2154
        %vm2156 = vcmp.eq.f32.partialorder %v2153, %v2155
        %v2157 = vsel %vm2156, %v2152, inf
        %2158 = vmin.xlane.f32.xlu0 %v2157
        %v2159 = vpop.xlane.xlu0 %2158
        %v2160 = vcvt.f32.s32 %v2159
        %v2161 = vcvt.f32.s32 %v2155
        %v2162 = vshll.u32 %v2161, 16
        %v2163 = vadd.s32 %v2162, %v2160
        %v2164 = vand.u32 %v2005, 65535
        %v2165 = vshra.s32 %v2005, 16
        %v2166 = vcvt.s32.f32 %v2164
        %v2167 = vcvt.s32.f32 %v2165
        %2168 = vmin.xlane.f32.xlu0 %v2167
        %v2169 = vpop.xlane.xlu0 %2168
        %vm2170 = vcmp.eq.f32.partialorder %v2167, %v2169
        %v2171 = vsel %vm2170, %v2166, inf
        %2172 = vmin.xlane.f32.xlu0 %v2171
        %v2173 = vpop.xlane.xlu0 %2172
        %v2174 = vcvt.f32.s32 %v2173
        %v2175 = vcvt.f32.s32 %v2169
        %v2176 = vshll.u32 %v2175, 16
        %v2177 = vadd.s32 %v2176, %v2174
        %v2178 = vand.u32 %v2006, 65535
        %v2179 = vshra.s32 %v2006, 16
        %v2180 = vcvt.s32.f32 %v2178
        %v2181 = vcvt.s32.f32 %v2179
        %2182 = vmin.xlane.f32.xlu0 %v2181
        %v2183 = vpop.xlane.xlu0 %2182
        %vm2184 = vcmp.eq.f32.partialorder %v2181, %v2183
        %v2185 = vsel %vm2184, %v2180, inf
        %2186 = vmin.xlane.f32.xlu0 %v2185
        %v2187 = vpop.xlane.xlu0 %2186
        %v2188 = vcvt.f32.s32 %v2187
        %v2189 = vcvt.f32.s32 %v2183
        %v2190 = vshll.u32 %v2189, 16
        %v2191 = vadd.s32 %v2190, %v2188
        %v2192 = vand.u32 %v2007, 65535
        %v2193 = vshra.s32 %v2007, 16
        %v2194 = vcvt.s32.f32 %v2192
        %v2195 = vcvt.s32.f32 %v2193
        %2196 = vmin.xlane.f32.xlu0 %v2195
        %v2197 = vpop.xlane.xlu0 %2196
        %vm2198 = vcmp.eq.f32.partialorder %v2195, %v2197
        %v2199 = vsel %vm2198, %v2194, inf
        %2200 = vmin.xlane.f32.xlu0 %v2199
        %v2201 = vpop.xlane.xlu0 %2200
        %v2202 = vcvt.f32.s32 %v2201
        %v2203 = vcvt.f32.s32 %v2197
        %v2204 = vshll.u32 %v2203, 16
        %v2205 = vadd.s32 %v2204, %v2202
        %v2206 = vand.u32 %v2008, 65535
        %v2207 = vshra.s32 %v2008, 16
        %v2208 = vcvt.s32.f32 %v2206
        %v2209 = vcvt.s32.f32 %v2207
        %2210 = vmin.xlane.f32.xlu0 %v2209
        %v2211 = vpop.xlane.xlu0 %2210
        %vm2212 = vcmp.eq.f32.partialorder %v2209, %v2211
        %v2213 = vsel %vm2212, %v2208, inf
        %2214 = vmin.xlane.f32.xlu0 %v2213
        %v2215 = vpop.xlane.xlu0 %2214
        %v2216 = vcvt.f32.s32 %v2215
        %v2217 = vcvt.f32.s32 %v2211
        %v2218 = vshll.u32 %v2217, 16
        %v2219 = vadd.s32 %v2218, %v2216
        %v2220 = vand.u32 %v2009, 65535
        %v2221 = vshra.s32 %v2009, 16
        %v2222 = vcvt.s32.f32 %v2220
        %v2223 = vcvt.s32.f32 %v2221
        %2224 = vmin.xlane.f32.xlu0 %v2223
        %v2225 = vpop.xlane.xlu0 %2224
        %vm2226 = vcmp.eq.f32.partialorder %v2223, %v2225
        %v2227 = vsel %vm2226, %v2222, inf
        %2228 = vmin.xlane.f32.xlu0 %v2227
        %v2229 = vpop.xlane.xlu0 %2228
        %v2230 = vcvt.f32.s32 %v2229
        %v2231 = vcvt.f32.s32 %v2225
        %v2232 = vshll.u32 %v2231, 16
        %v2233 = vadd.s32 %v2232, %v2230
        %2234 = vst [vmem:[%s372] sm:$0xff] %v2023
        %2235 = vst [vmem:[%s372 + $0x8] sm:$0xff] %v2037
        %2236 = vst [vmem:[%s372 + $0x10] sm:$0xff] %v2051
        %2237 = vst [vmem:[%s372 + $0x18] sm:$0xff] %v2065
        %2238 = vst [vmem:[%s372 + $0x20] sm:$0xff] %v2079
        %2239 = vst [vmem:[%s372 + $0x28] sm:$0xff] %v2093
        %2240 = vst [vmem:[%s372 + $0x30] sm:$0xff] %v2107
        %2241 = vst [vmem:[%s372 + $0x38] sm:$0xff] %v2121
        %2242 = vst [vmem:[%s372 + $0x40] sm:$0xff] %v2135
        %2243 = vst [vmem:[%s372 + $0x48] sm:$0xff] %v2149
        %2244 = vst [vmem:[%s372 + $0x50] sm:$0xff] %v2163
        %2245 = vst [vmem:[%s372 + $0x58] sm:$0xff] %v2177
        %2246 = vst [vmem:[%s372 + $0x60] sm:$0xff] %v2191
        %2247 = vst [vmem:[%s372 + $0x68] sm:$0xff] %v2205
        %2248 = vst [vmem:[%s372 + $0x70] sm:$0xff] %v2219
        %2249 = vst [vmem:[%s372 + $0x78] sm:$0xff] %v2233
        %s2250 = sand.u32 %s154, 1
        %s2251 = scalar_lea.sflag [#allocation4], %s2250
        %s2252 = sand.u32 %s154, 1
        %s2253 = smul.addr %s2252, 128
        %s2254 = scalar_lea.vmem [#allocation11], %s2253
        %s2255 = sand.u32 %s180, 1
        %s2256 = scalar_lea.sflag [#allocation13], %s2255
        %s2257 = sand.u32 %s180, 1
        %s2258 = smul.addr %s2257, 128
        %s2259 = scalar_lea.vmem [#allocation12], %s2258
        // Predicated region
        $region61: #{tpu_custom_call.1} parent=39 // pred_check
          %p2260 = pneg %p164
        $region62: #{tpu_custom_call.1} parent=39 // pred_check_branch
          %2262 = sbr.rel (%p2260) target = $region64
        $region63: #{tpu_custom_call.1} parent=39 // pred_region
          %s2263 = smul.u32 16, %s31
          %2265 = vsyncadd %s2251, 0
          %s2266 = smul.addr %s2263, 8
          %s2267 = scalar_lea.hbm %s5, %s2266
          %s2268 = sshll.u32 %s2254, 4
          %s2269 = int_to_ptr.vmem [resolvable:$true] %s2268
          %s2270 = sshll.u32 %s2267, 4
          %s2271 = int_to_ptr.hbm [resolvable:$true] %s2270
          %2276 = dma.vmem_to_hbm [thread:$0]  %s2269, 2048, %s2271, %s2251, 128, 128, 8
        $region64: #{tpu_custom_call.1} parent=39 // pred_fallthru
          _
        // Predicated region
        $region65: #{tpu_custom_call.1} parent=39 // pred_check
          %p2277 = pneg %p190
        $region66: #{tpu_custom_call.1} parent=39 // pred_check_branch
          %2279 = sbr.rel (%p2277) target = $region68
        $region67: #{tpu_custom_call.1} parent=39 // pred_region
          %s2280 = smul.u32 16, %s31
          %2282 = vsyncadd %s2256, 0
          %s2283 = smul.addr %s2280, 8
          %s2284 = scalar_lea.hbm %s6, %s2283
          %s2285 = sshll.u32 %s2259, 4
          %s2286 = int_to_ptr.vmem [resolvable:$true] %s2285
          %s2287 = sshll.u32 %s2284, 4
          %s2288 = int_to_ptr.hbm [resolvable:$true] %s2287
          %2293 = dma.vmem_to_hbm [thread:$0]  %s2286, 2048, %s2288, %s2256, 128, 128, 8
        $region68: #{tpu_custom_call.1} parent=39 // pred_fallthru
          _
      $region40: #{tpu_custom_call.1} parent=5 // pred_fallthru
        _
      %p2294 = scmp.le.s32.totalorder 2, %s26
      // Predicated region
      $region69: #{tpu_custom_call.1} parent=5 // pred_check
        %p2295 = pneg %p2294
      $region70: #{tpu_custom_call.1} parent=5 // pred_check_branch
        %2297 = sbr.rel (%p2295) target = $region72
      $region71: #{tpu_custom_call.1} parent=5 // pred_region
        %s2298 = ssub.s32 %s26, 2
        // Predicated region
        $region73: #{tpu_custom_call.1} parent=71 // pred_check
          %p2299 = pneg %p170
        $region74: #{tpu_custom_call.1} parent=71 // pred_check_branch
          %2301 = sbr.rel (%p2299) target = $region76
        $region75: #{tpu_custom_call.1} parent=71 // pred_region
          %s2302 = sand.u32 %s155, 1
          %s2303 = scalar_lea.sflag [#allocation4], %s2302
          %s2304 = sand.u32 %s155, 1
          %s2305 = smul.addr %s2304, 128
          %s2306 = scalar_lea.vmem [#allocation11], %s2305
          %2308 = dma.done %s2303, 2048
        $region76: #{tpu_custom_call.1} parent=71 // pred_fallthru
          _
        // Predicated region
        $region77: #{tpu_custom_call.1} parent=71 // pred_check
          %p2309 = pneg %p196
        $region78: #{tpu_custom_call.1} parent=71 // pred_check_branch
          %2311 = sbr.rel (%p2309) target = $region80
        $region79: #{tpu_custom_call.1} parent=71 // pred_region
          %s2312 = sand.u32 %s181, 1
          %s2313 = scalar_lea.sflag [#allocation13], %s2312
          %s2314 = sand.u32 %s181, 1
          %s2315 = smul.addr %s2314, 128
          %s2316 = scalar_lea.vmem [#allocation12], %s2315
          %2318 = dma.done %s2313, 2048
        $region80: #{tpu_custom_call.1} parent=71 // pred_fallthru
          _
      $region72: #{tpu_custom_call.1} parent=5 // pred_fallthru
        _
    $region6: #{tpu_custom_call.1} parent=1 // loop_footer
      %s30 = sadd.s32 1, %s26
    $region7: #{tpu_custom_call.1} parent=1 // loop_footer_branch
      %25 = sbr.rel target = $region3
    $region8: #{tpu_custom_call.1} parent=1 // loop_exit
      _
    %2319 = vsyncpa [#allocation3], 1
    %s2320 = scalar_lea.sflag [#allocation3], 1
    %2321 = vsyncpa %s2320, 1
    %2322 = vsyncpa [#allocation6], 1
    %s2323 = scalar_lea.sflag [#allocation6], 1
    %2324 = vsyncpa %s2323, 1
    %2325 = vsyncpa [#allocation9], 1
    %2326 = vsyncpa [#allocation4], 1
    %s2327 = scalar_lea.sflag [#allocation4], 1
    %2328 = vsyncpa %s2327, 1
    %2329 = vsyncpa [#allocation13], 1
    %s2330 = scalar_lea.sflag [#allocation13], 1
    %2331 = vsyncpa %s2330, 1

</llo_original>
